<compile_context>
chip_gen: v7x
topology: tpu7x:2x2x1
jax: 0.10.0
libtpu: 0.0.40
codegen_flags: <defaults>
</compile_context>

<pallas_src>
import functools
import math

import jax
import jax.numpy as jnp
from jax.experimental import pallas as pl
from jax.experimental.pallas import tpu as pltpu


def _round_up(x, m):
    return (x + m - 1) // m * m


def _vmem_limit_bytes():
    """Scoped-VMEM budget: ~3/4 of physical VMEM (48 MiB on v7x, 96 MiB on v5e/v6e)."""
    try:
        cap = pltpu.get_tpu_info().vmem_capacity_bytes
    except Exception:
        cap = 64 * 1024 * 1024
    return min(96 * 1024 * 1024, (cap * 3) // 4)


def _choose_tiles(n, tile_m=512, tile_k=1024, min_row_tiles=2):
    """Pick A tile sizes (tm x tk) and padded node count.

    Layout rules: tm (sublane) multiple of 8, tk (lane) multiple of 128 or == full dim;
    both must divide n_pad.  tm/tk are decoupled (no tk % tm constraint) and the row
    axis is split into >= min_row_tiles tiles when possible so megacore (v7x) can shard it.
    """
    assert tile_m % 8 == 0 and tile_k % 128 == 0
    n8 = _round_up(n, 8)
    if n8 <= tile_k:
        n_pad = _round_up(n8, 128)
        tk = n_pad                      # == full array dim -> layout-legal
    else:
        n_pad = _round_up(n8, tile_k)
        tk = tile_k
    tm = math.gcd(n_pad, min(tile_m, n_pad))     # multiple of 8, divides n_pad
    while (n_pad // tm) < min_row_tiles and tm % 16 == 0:
        tm //= 2                                  # keep both TCs busy on v7x
    return tm, tk, n_pad


def build_adjacency(edge_index, edge_weight, n_pad):
    """Dense A[dst, src] padded to (n_pad, n_pad), built ONCE per static subgraph.

    f32 scatter-add (duplicate edges summed exactly) then a single cast to bf16 to
    halve HBM traffic of the streamed A tiles.
    """
    src, dst = edge_index[0], edge_index[1]
    adj = jnp.zeros((n_pad, n_pad), jnp.float32).at[dst, src].add(edge_weight)
    return adj.astype(jnp.bfloat16)


# ---------------- layer 1: x1 = relu((A @ x0) @ W1_rel^T + x0 @ W1_root^T + b1) --------

def _gconv_relu_kernel(a_ref, x_ref, w_rel_ref, w_root_ref, b_ref,
                       out_ref, acc_ref, *, tile_m, tile_k):
    i = pl.program_id(0)          # destination-node row tile  ("parallel")
    k = pl.program_id(1)          # source-node reduction tile ("arbitrary", last)

    @pl.when(k == 0)
    def _init():
        acc_ref[...] = jnp.zeros_like(acc_ref)

    # neighbor aggregation: acc += A[i-tile, k-tile] @ x[k-tile]   (bf16 MXU, f32 acc)
    x_k = x_ref[pl.ds(pl.multiple_of(k * tile_k, tile_k), tile_k), :]
    acc_ref[...] += jnp.dot(a_ref[...], x_k, preferred_element_type=jnp.float32)

    @pl.when(k == pl.num_programs(1) - 1)
    def _epilogue():
        x_i = x_ref[pl.ds(pl.multiple_of(i * tile_m, tile_m), tile_m), :]
        h = (jnp.dot(acc_ref[...].astype(jnp.bfloat16), w_rel_ref[...],
                     preferred_element_type=jnp.float32)
             + jnp.dot(x_i, w_root_ref[...], preferred_element_type=jnp.float32)
             + b_ref[...])
        # dropout(p=0.2, training=False) == identity; emit bf16 so layer 2's resident
        # x1 needs no per-step cast and half the HBM writeback / VMEM footprint.
        out_ref[...] = jnp.maximum(h, 0.0).astype(out_ref.dtype)


# -------- layer 2 + final linear:  out = x1 @ Wl1 + relu(gconv2(x1)) @ Wl2 + bl --------

def _gconv_relu_lin_kernel(a_ref, x1_ref, w_rel_ref, w_root_ref, b_ref,
                           wl1_ref, wl2_ref, bl_ref,
                           out_ref, acc_ref, *, tile_m, tile_k):
    i = pl.program_id(0)
    k = pl.program_id(1)

    @pl.when(k == 0)
    def _init():
        acc_ref[...] = jnp.zeros_like(acc_ref)

    x_k = x1_ref[pl.ds(pl.multiple_of(k * tile_k, tile_k), tile_k), :]
    acc_ref[...] += jnp.dot(a_ref[...], x_k, preferred_element_type=jnp.float32)

    @pl.when(k == pl.num_programs(1) - 1)
    def _epilogue():
        x1_i = x1_ref[pl.ds(pl.multiple_of(i * tile_m, tile_m), tile_m), :]
        h2 = (jnp.dot(acc_ref[...].astype(jnp.bfloat16), w_rel_ref[...],
                      preferred_element_type=jnp.float32)
              + jnp.dot(x1_i, w_root_ref[...], preferred_element_type=jnp.float32)
              + b_ref[...])
        x2_i = jnp.maximum(h2, 0.0).astype(jnp.bfloat16)   # dropout == identity (eval)
        # lin(cat([x1, x2], -1)) == x1 @ Wl[:, :H]^T + x2 @ Wl[:, H:]^T + bl
        out_ref[...] = (jnp.dot(x1_i, wl1_ref[...], preferred_element_type=jnp.float32)
                        + jnp.dot(x2_i, wl2_ref[...], preferred_element_type=jnp.float32)
                        + bl_ref[...])


# --------------------------------- wrapper --------------------------------------------

def net_forward(x0, adj, params, *, tile_m, tile_k):
    """x0: (N, Fin) f32; adj: (N_pad, N_pad) bf16 from build_adjacency(); params from
    prepare_params().  tile_m/tile_k must come from _choose_tiles(N, ...)."""
    n, fin = x0.shape
    n_pad = adj.shape[0]
    hidden = params["w1_rel_t"].shape[1]
    out_ch = params["bl"].shape[1]

    assert n_pad % tile_m == 0 and tile_m % 8 == 0
    assert n_pad % tile_k == 0 and (tile_k % 128 == 0 or tile_k == n_pad)
    grid = (n_pad // tile_m, n_pad // tile_k)

    # resident node features in bf16 (cast once, outside the k-loop)
    x0p = jnp.zeros((n_pad, fin), jnp.bfloat16).at[:n, :].set(x0.astype(jnp.bfloat16))

    compiler_params = pltpu.CompilerParams(
        dimension_semantics=("parallel", "arbitrary"),
        vmem_limit_bytes=_vmem_limit_bytes())

    def _resident(shape):
        # full-array block, fetched once and kept resident in VMEM
        return pl.BlockSpec(shape, lambda i, k: (0,) * len(shape))

    # ---- layer 1: x1 (bf16) ----
    x1p = pl.pallas_call(
        functools.partial(_gconv_relu_kernel, tile_m=tile_m, tile_k=tile_k),
        out_shape=jax.ShapeDtypeStruct((n_pad, hidden), jnp.bfloat16),
        grid_spec=pltpu.PrefetchScalarGridSpec(
            num_scalar_prefetch=0,
            grid=grid,
            in_specs=[
                pl.BlockSpec((tile_m, tile_k), lambda i, k: (i, k)),   # A (bf16, streamed)
                _resident((n_pad, fin)),                               # x0 (bf16, resident)
                _resident((fin, hidden)),                              # W1_rel^T (bf16)
                _resident((fin, hidden)),                              # W1_root^T (bf16)
                _resident((1, hidden)),                                # b1 (f32)
            ],
            out_specs=pl.BlockSpec((tile_m, hidden), lambda i, k: (i, 0)),
            scratch_shapes=[pltpu.VMEM((tile_m, fin), jnp.float32)],
        ),
        compiler_params=compiler_params,
        cost_estimate=pl.CostEstimate(
            flops=2 * n_pad * n_pad * fin + 4 * n_pad * fin * hidden,
            transcendentals=0,
            bytes_accessed=2 * n_pad * n_pad + 2 * n_pad * (fin + hidden)),
    )(adj, x0p, params["w1_rel_t"], params["w1_root_t"], params["b1"])

    # ---- layer 2 + final linear ----
    outp = pl.pallas_call(
        functools.partial(_gconv_relu_lin_kernel, tile_m=tile_m, tile_k=tile_k),
        out_shape=jax.ShapeDtypeStruct((n_pad, out_ch), jnp.float32),
        grid_spec=pltpu.PrefetchScalarGridSpec(
            num_scalar_prefetch=0,
            grid=grid,
            in_specs=[
                pl.BlockSpec((tile_m, tile_k), lambda i, k: (i, k)),   # A (bf16, streamed)
                _resident((n_pad, hidden)),                            # x1 (bf16, resident)
                _resident((hidden, hidden)),                           # W2_rel^T (bf16)
                _resident((hidden, hidden)),                           # W2_root^T (bf16)
                _resident((1, hidden)),                                # b2 (f32)
                _resident((hidden, out_ch)),                           # Wl[:, :H]^T (bf16)
                _resident((hidden, out_ch)),                           # Wl[:, H:]^T (bf16)
                _resident((1, out_ch)),                                # bl (f32)
            ],
            out_specs=pl.BlockSpec((tile_m, out_ch), lambda i, k: (i, 0)),
            scratch_shapes=[pltpu.VMEM((tile_m, hidden), jnp.float32)],
        ),
        compiler_params=compiler_params,
        cost_estimate=pl.CostEstimate(
            flops=(2 * n_pad * n_pad * hidden + 4 * n_pad * hidden * hidden
                   + 4 * n_pad * hidden * out_ch),
            transcendentals=0,
            bytes_accessed=2 * n_pad * n_pad + 2 * n_pad * (2 * hidden + 2 * out_ch)),
    )(adj, x1p, params["w2_rel_t"], params["w2_root_t"], params["b2"],
      params["wl1_t"], params["wl2_t"], params["bl"])

    return outp[:n]


# --------------------------------- params / reference ---------------------------------

def make_params(key, in_channels, hidden_channels, out_channels):
    ks = jax.random.split(key, 8)
    s = 0.1
    return {
        # GraphConv1: lin_rel (with bias), lin_root (no bias)
        "w1_rel":  s * jax.random.normal(ks[0], (hidden_channels, in_channels), jnp.float32),
        "w1_root": s * jax.random.normal(ks[1], (hidden_channels, in_channels), jnp.float32),
        "b1":      s * jax.random.normal(ks[2], (hidden_channels,), jnp.float32),
        # GraphConv2
        "w2_rel":  s * jax.random.normal(ks[3], (hidden_channels, hidden_channels), jnp.float32),
        "w2_root": s * jax.random.normal(ks[4], (hidden_channels, hidden_channels), jnp.float32),
        "b2":      s * jax.random.normal(ks[5], (hidden_channels,), jnp.float32),
        # Final Linear(2*hidden -> out)
        "wl":      s * jax.random.normal(ks[6], (out_channels, 2 * hidden_channels), jnp.float32),
        "bl":      s * jax.random.normal(ks[7], (out_channels,), jnp.float32),
    }


def prepare_params(p):
    """Hoist weight transposes / bias reshapes / bf16 casts out of the forward pass."""
    hidden = p["w1_rel"].shape[0]
    bf = lambda a: a.astype(jnp.bfloat16)
    return {
        "w1_rel_t": bf(p["w1_rel"].T), "w1_root_t": bf(p["w1_root"].T),
        "b1": p["b1"].reshape(1, -1),
        "w2_rel_t": bf(p["w2_rel"].T), "w2_root_t": bf(p["w2_root"].T),
        "b2": p["b2"].reshape(1, -1),
        "wl1_t": bf(p["wl"][:, :hidden].T), "wl2_t": bf(p["wl"][:, hidden:].T),
        "bl": p["bl"].reshape(1, -1),
    }


def reference_forward(x0, edge_index, edge_weight, params):
    """Pure-JAX f32 reference matching PyG GraphConv (aggr='add'), eval-mode dropout."""
    n = x0.shape[0]
    src, dst = edge_index[0], edge_index[1]
    adj = jnp.zeros((n, n), jnp.float32).at[dst, src].add(edge_weight)

    def graph_conv(x, w_rel, w_root, b):
        return (adj @ x) @ w_rel.T + x @ w_root.T + b

    x1 = jax.nn.relu(graph_conv(x0, params["w1_rel"], params["w1_root"], params["b1"]))
    x2 = jax.nn.relu(graph_conv(x1, params["w2_rel"], params["w2_root"], params["b2"]))
    x = jnp.concatenate([x1, x2], axis=-1)
    return x @ params["wl"].T + params["bl"]


if __name__ == "__main__":
    key = jax.random.PRNGKey(0)
    k_x, k_e, k_w, k_p = jax.random.split(key, 4)

    num_nodes = 200
    in_channels = 4          # data.num_features (synthetic)
    hidden_channels = 32
    out_channels = 4         # data.num_classes (synthetic)
    num_edges = 800

    x0 = jax.random.normal(k_x, (num_nodes, in_channels), jnp.float32)
    edge_index = jax.random.randint(k_e, (2, num_edges), 0, num_nodes, jnp.int32)
    edge_weight = jax.random.uniform(k_w, (num_edges,), jnp.float32)

    raw_params = make_params(k_p, in_channels, hidden_channels, out_channels)
    params = prepare_params(raw_params)      # transposes / bf16 casts hoisted out

    # small tiles so the test exercises the multi-tile (parallel, arbitrary) grid + padding
    tm, tk, n_pad = _choose_tiles(num_nodes, tile_m=64, tile_k=128)
    adj = jax.block_until_ready(build_adjacency(edge_index, edge_weight, n_pad))  # once

    fwd = jax.jit(functools.partial(net_forward, tile_m=tm, tile_k=tk))
    out = jax.block_until_ready(fwd(x0, adj, params))

    ref = reference_forward(x0, edge_index, edge_weight, raw_params)
    assert out.shape == (num_nodes, out_channels)
    # bf16 adjacency / features / weights (f32 accumulation) => relaxed tolerance
    assert jnp.allclose(out, ref, atol=5e-2, rtol=5e-2), float(jnp.max(jnp.abs(out - ref)))
    print("KERNEL_OK")
</pallas_src>

<mosaic_0001>
module attributes {stable_mosaic.version = 11 : i64} {
  func.func @_gconv_relu_kernel(%arg0: i32, %arg1: i32, %arg2: memref<64x128xbf16, #tpu.memory_space<vmem>>, %arg3: memref<256x4xbf16, #tpu.memory_space<vmem>>, %arg4: memref<4x32xbf16, #tpu.memory_space<vmem>>, %arg5: memref<4x32xbf16, #tpu.memory_space<vmem>>, %arg6: memref<1x32xf32, #tpu.memory_space<vmem>>, %arg7: memref<64x32xbf16, #tpu.memory_space<vmem>>, %arg8: memref<64x4xf32, #tpu.memory_space<vmem>>) attributes {dimension_semantics = [#tpu.dimension_semantics<parallel>, #tpu.dimension_semantics<arbitrary>], iteration_bounds = array<i64: 4, 2>, scalar_prefetch = 0 : i64, scratch_operands = 1 : i64, tpu.core_type = #tpu.core_type<tc>, window_params = [{transform_indices = @transform_0, window_bounds = array<i64: 64, 128>}, {pipeline_mode = #tpu.pipeline_mode<synchronous>, transform_indices = @transform_1, window_bounds = array<i64: 256, 4>}, {pipeline_mode = #tpu.pipeline_mode<synchronous>, transform_indices = @transform_2, window_bounds = array<i64: 4, 32>}, {pipeline_mode = #tpu.pipeline_mode<synchronous>, transform_indices = @transform_3, window_bounds = array<i64: 4, 32>}, {pipeline_mode = #tpu.pipeline_mode<synchronous>, transform_indices = @transform_4, window_bounds = array<i64: 1, 32>}, {transform_indices = @transform_5, window_bounds = array<i64: 64, 32>}]} {
    %c0_i32 = arith.constant 0 : i32
    %0 = arith.cmpi eq, %arg1, %c0_i32 : i32
    %1 = arith.extui %0 : i1 to i32
    %c0_i32_0 = arith.constant 0 : i32
    %2 = arith.cmpi ne, %1, %c0_i32_0 : i32
    scf.if %2 {
      %cst_8 = arith.constant 0.000000e+00 : f32
      %15 = vector.broadcast %cst_8 : f32 to vector<64x4xf32>
      %c0_9 = arith.constant 0 : index
      %c0_10 = arith.constant 0 : index
      %16 = vector.load %arg8[%c0_9, %c0_10] : memref<64x4xf32, #tpu.memory_space<vmem>>, vector<64x4xf32>
      tpu.vector_store %arg8[%c0_9, %c0_10], %15 {strides = array<i32>} : memref<64x4xf32, #tpu.memory_space<vmem>>, vector<64x4xf32>,
    } else {
    }
    %c128_i32 = arith.constant 128 : i32
    %3 = arith.muli %arg1, %c128_i32 : i32
    %4 = tpu.assume_multiple %3, 128 : i32
    %5 = arith.index_cast %4 : i32 to index
    %c0 = arith.constant 0 : index
    %6 = vector.load %arg3[%5, %c0] : memref<256x4xbf16, #tpu.memory_space<vmem>>, vector<128x4xbf16>
    %c0_1 = arith.constant 0 : index
    %c0_2 = arith.constant 0 : index
    %7 = vector.load %arg8[%c0_1, %c0_2] : memref<64x4xf32, #tpu.memory_space<vmem>>, vector<64x4xf32>
    %c0_3 = arith.constant 0 : index
    %c0_4 = arith.constant 0 : index
    %8 = vector.load %arg2[%c0_3, %c0_4] : memref<64x128xbf16, #tpu.memory_space<vmem>>, vector<64x128xbf16>
    %cst = arith.constant dense<0.000000e+00> : vector<64x4xf32>
    %9 = tpu.matmul %8, %6, %cst {dimension_numbers = #tpu.dot_dimension_numbers<[1], [0], [0], [1], [0, 0, 1, 1], [], []>} : vector<64x128xbf16>, vector<128x4xbf16>, vector<64x4xf32> -> vector<64x4xf32>
    %10 = arith.addf %7, %9 : vector<64x4xf32>
    %c0_5 = arith.constant 0 : index
    %c0_6 = arith.constant 0 : index
    %11 = vector.load %arg8[%c0_5, %c0_6] : memref<64x4xf32, #tpu.memory_space<vmem>>, vector<64x4xf32>
    tpu.vector_store %arg8[%c0_5, %c0_6], %10 {strides = array<i32>} : memref<64x4xf32, #tpu.memory_space<vmem>>, vector<64x4xf32>,
    %c1_i32 = arith.constant 1 : i32
    %12 = arith.cmpi eq, %arg1, %c1_i32 : i32
    %13 = arith.extui %12 : i1 to i32
    %c0_i32_7 = arith.constant 0 : i32
    %14 = arith.cmpi ne, %13, %c0_i32_7 : i32
    scf.if %14 {
      %c64_i32 = arith.constant 64 : i32
      %15 = arith.muli %arg0, %c64_i32 : i32
      %16 = tpu.assume_multiple %15, 64 : i32
      %17 = arith.index_cast %16 : i32 to index
      %c0_8 = arith.constant 0 : index
      %18 = vector.load %arg3[%17, %c0_8] : memref<256x4xbf16, #tpu.memory_space<vmem>>, vector<64x4xbf16>
      %c0_9 = arith.constant 0 : index
      %c0_10 = arith.constant 0 : index
      %19 = vector.load %arg8[%c0_9, %c0_10] : memref<64x4xf32, #tpu.memory_space<vmem>>, vector<64x4xf32>
      %20 = arith.truncf %19 : vector<64x4xf32> to vector<64x4xbf16>
      %c0_11 = arith.constant 0 : index
      %c0_12 = arith.constant 0 : index
      %21 = vector.load %arg4[%c0_11, %c0_12] : memref<4x32xbf16, #tpu.memory_space<vmem>>, vector<4x32xbf16>
      %cst_13 = arith.constant dense<0.000000e+00> : vector<64x32xf32>
      %22 = tpu.matmul %20, %21, %cst_13 {dimension_numbers = #tpu.dot_dimension_numbers<[1], [0], [0], [1], [0, 0, 1, 1], [], []>} : vector<64x4xbf16>, vector<4x32xbf16>, vector<64x32xf32> -> vector<64x32xf32>
      %c0_14 = arith.constant 0 : index
      %c0_15 = arith.constant 0 : index
      %23 = vector.load %arg5[%c0_14, %c0_15] : memref<4x32xbf16, #tpu.memory_space<vmem>>, vector<4x32xbf16>
      %cst_16 = arith.constant dense<0.000000e+00> : vector<64x32xf32>
      %24 = tpu.matmul %18, %23, %cst_16 {dimension_numbers = #tpu.dot_dimension_numbers<[1], [0], [0], [1], [0, 0, 1, 1], [], []>} : vector<64x4xbf16>, vector<4x32xbf16>, vector<64x32xf32> -> vector<64x32xf32>
      %25 = arith.addf %22, %24 : vector<64x32xf32>
      %c0_17 = arith.constant 0 : index
      %c0_18 = arith.constant 0 : index
      %26 = vector.load %arg6[%c0_17, %c0_18] : memref<1x32xf32, #tpu.memory_space<vmem>>, vector<1x32xf32>
      %27 = vector.broadcast %26 : vector<1x32xf32> to vector<64x32xf32>
      %28 = arith.addf %25, %27 : vector<64x32xf32>
      %cst_19 = arith.constant 0.000000e+00 : f32
      %29 = vector.broadcast %cst_19 : f32 to vector<64x32xf32>
      %30 = arith.maximumf %28, %29 : vector<64x32xf32>
      %31 = arith.truncf %30 : vector<64x32xf32> to vector<64x32xbf16>
      %c0_20 = arith.constant 0 : index
      %c0_21 = arith.constant 0 : index
      %32 = vector.load %arg7[%c0_20, %c0_21] : memref<64x32xbf16, #tpu.memory_space<vmem>>, vector<64x32xbf16>
      tpu.vector_store %arg7[%c0_20, %c0_21], %31 {strides = array<i32>} : memref<64x32xbf16, #tpu.memory_space<vmem>>, vector<64x32xbf16>,
    } else {
    }
    return
  }
  func.func @transform_0(%arg0: i32, %arg1: i32) -> (i32, i32) {
    %c0_i32 = arith.constant 0 : i32
    return %arg0, %arg1 : i32, i32
  }
  func.func @transform_1(%arg0: i32, %arg1: i32) -> (i32, i32) {
    %c0_i32 = arith.constant 0 : i32
    %c0_i32_0 = arith.constant 0 : i32
    %c0_i32_1 = arith.constant 0 : i32
    return %c0_i32, %c0_i32_0 : i32, i32
  }
  func.func @transform_2(%arg0: i32, %arg1: i32) -> (i32, i32) {
    %c0_i32 = arith.constant 0 : i32
    %c0_i32_0 = arith.constant 0 : i32
    %c0_i32_1 = arith.constant 0 : i32
    return %c0_i32, %c0_i32_0 : i32, i32
  }
  func.func @transform_3(%arg0: i32, %arg1: i32) -> (i32, i32) {
    %c0_i32 = arith.constant 0 : i32
    %c0_i32_0 = arith.constant 0 : i32
    %c0_i32_1 = arith.constant 0 : i32
    return %c0_i32, %c0_i32_0 : i32, i32
  }
  func.func @transform_4(%arg0: i32, %arg1: i32) -> (i32, i32) {
    %c0_i32 = arith.constant 0 : i32
    %c0_i32_0 = arith.constant 0 : i32
    %c0_i32_1 = arith.constant 0 : i32
    return %c0_i32, %c0_i32_0 : i32, i32
  }
  func.func @transform_5(%arg0: i32, %arg1: i32) -> (i32, i32) {
    %c0_i32 = arith.constant 0 : i32
    %c0_i32_0 = arith.constant 0 : i32
    return %arg0, %c0_i32 : i32, i32
  }
}

module attributes {stable_mosaic.version = 11 : i64} {
  func.func @_gconv_relu_lin_kernel(%arg0: i32, %arg1: i32, %arg2: memref<64x128xbf16, #tpu.memory_space<vmem>>, %arg3: memref<256x32xbf16, #tpu.memory_space<vmem>>, %arg4: memref<32x32xbf16, #tpu.memory_space<vmem>>, %arg5: memref<32x32xbf16, #tpu.memory_space<vmem>>, %arg6: memref<1x32xf32, #tpu.memory_space<vmem>>, %arg7: memref<32x4xbf16, #tpu.memory_space<vmem>>, %arg8: memref<32x4xbf16, #tpu.memory_space<vmem>>, %arg9: memref<1x4xf32, #tpu.memory_space<vmem>>, %arg10: memref<64x4xf32, #tpu.memory_space<vmem>>, %arg11: memref<64x32xf32, #tpu.memory_space<vmem>>) attributes {dimension_semantics = [#tpu.dimension_semantics<parallel>, #tpu.dimension_semantics<arbitrary>], iteration_bounds = array<i64: 4, 2>, scalar_prefetch = 0 : i64, scratch_operands = 1 : i64, tpu.core_type = #tpu.core_type<tc>, window_params = [{transform_indices = @transform_0, window_bounds = array<i64: 64, 128>}, {pipeline_mode = #tpu.pipeline_mode<synchronous>, transform_indices = @transform_1, window_bounds = array<i64: 256, 32>}, {pipeline_mode = #tpu.pipeline_mode<synchronous>, transform_indices = @transform_2, window_bounds = array<i64: 32, 32>}, {pipeline_mode = #tpu.pipeline_mode<synchronous>, transform_indices = @transform_3, window_bounds = array<i64: 32, 32>}, {pipeline_mode = #tpu.pipeline_mode<synchronous>, transform_indices = @transform_4, window_bounds = array<i64: 1, 32>}, {pipeline_mode = #tpu.pipeline_mode<synchronous>, transform_indices = @transform_5, window_bounds = array<i64: 32, 4>}, {pipeline_mode = #tpu.pipeline_mode<synchronous>, transform_indices = @transform_6, window_bounds = array<i64: 32, 4>}, {pipeline_mode = #tpu.pipeline_mode<synchronous>, transform_indices = @transform_7, window_bounds = array<i64: 1, 4>}, {transform_indices = @transform_8, window_bounds = array<i64: 64, 4>}]} {
    %c0_i32 = arith.constant 0 : i32
    %0 = arith.cmpi eq, %arg1, %c0_i32 : i32
    %1 = arith.extui %0 : i1 to i32
    %c0_i32_0 = arith.constant 0 : i32
    %2 = arith.cmpi ne, %1, %c0_i32_0 : i32
    scf.if %2 {
      %cst_8 = arith.constant 0.000000e+00 : f32
      %15 = vector.broadcast %cst_8 : f32 to vector<64x32xf32>
      %c0_9 = arith.constant 0 : index
      %c0_10 = arith.constant 0 : index
      %16 = vector.load %arg11[%c0_9, %c0_10] : memref<64x32xf32, #tpu.memory_space<vmem>>, vector<64x32xf32>
      tpu.vector_store %arg11[%c0_9, %c0_10], %15 {strides = array<i32>} : memref<64x32xf32, #tpu.memory_space<vmem>>, vector<64x32xf32>,
    } else {
    }
    %c128_i32 = arith.constant 128 : i32
    %3 = arith.muli %arg1, %c128_i32 : i32
    %4 = tpu.assume_multiple %3, 128 : i32
    %5 = arith.index_cast %4 : i32 to index
    %c0 = arith.constant 0 : index
    %6 = vector.load %arg3[%5, %c0] : memref<256x32xbf16, #tpu.memory_space<vmem>>, vector<128x32xbf16>
    %c0_1 = arith.constant 0 : index
    %c0_2 = arith.constant 0 : index
    %7 = vector.load %arg11[%c0_1, %c0_2] : memref<64x32xf32, #tpu.memory_space<vmem>>, vector<64x32xf32>
    %c0_3 = arith.constant 0 : index
    %c0_4 = arith.constant 0 : index
    %8 = vector.load %arg2[%c0_3, %c0_4] : memref<64x128xbf16, #tpu.memory_space<vmem>>, vector<64x128xbf16>
    %cst = arith.constant dense<0.000000e+00> : vector<64x32xf32>
    %9 = tpu.matmul %8, %6, %cst {dimension_numbers = #tpu.dot_dimension_numbers<[1], [0], [0], [1], [0, 0, 1, 1], [], []>} : vector<64x128xbf16>, vector<128x32xbf16>, vector<64x32xf32> -> vector<64x32xf32>
    %10 = arith.addf %7, %9 : vector<64x32xf32>
    %c0_5 = arith.constant 0 : index
    %c0_6 = arith.constant 0 : index
    %11 = vector.load %arg11[%c0_5, %c0_6] : memref<64x32xf32, #tpu.memory_space<vmem>>, vector<64x32xf32>
    tpu.vector_store %arg11[%c0_5, %c0_6], %10 {strides = array<i32>} : memref<64x32xf32, #tpu.memory_space<vmem>>, vector<64x32xf32>,
    %c1_i32 = arith.constant 1 : i32
    %12 = arith.cmpi eq, %arg1, %c1_i32 : i32
    %13 = arith.extui %12 : i1 to i32
    %c0_i32_7 = arith.constant 0 : i32
    %14 = arith.cmpi ne, %13, %c0_i32_7 : i32
    scf.if %14 {
      %c64_i32 = arith.constant 64 : i32
      %15 = arith.muli %arg0, %c64_i32 : i32
      %16 = tpu.assume_multiple %15, 64 : i32
      %17 = arith.index_cast %16 : i32 to index
      %c0_8 = arith.constant 0 : index
      %18 = vector.load %arg3[%17, %c0_8] : memref<256x32xbf16, #tpu.memory_space<vmem>>, vector<64x32xbf16>
      %c0_9 = arith.constant 0 : index
      %c0_10 = arith.constant 0 : index
      %19 = vector.load %arg11[%c0_9, %c0_10] : memref<64x32xf32, #tpu.memory_space<vmem>>, vector<64x32xf32>
      %20 = arith.truncf %19 : vector<64x32xf32> to vector<64x32xbf16>
      %c0_11 = arith.constant 0 : index
      %c0_12 = arith.constant 0 : index
      %21 = vector.load %arg4[%c0_11, %c0_12] : memref<32x32xbf16, #tpu.memory_space<vmem>>, vector<32x32xbf16>
      %cst_13 = arith.constant dense<0.000000e+00> : vector<64x32xf32>
      %22 = tpu.matmul %20, %21, %cst_13 {dimension_numbers = #tpu.dot_dimension_numbers<[1], [0], [0], [1], [0, 0, 1, 1], [], []>} : vector<64x32xbf16>, vector<32x32xbf16>, vector<64x32xf32> -> vector<64x32xf32>
      %c0_14 = arith.constant 0 : index
      %c0_15 = arith.constant 0 : index
      %23 = vector.load %arg5[%c0_14, %c0_15] : memref<32x32xbf16, #tpu.memory_space<vmem>>, vector<32x32xbf16>
      %cst_16 = arith.constant dense<0.000000e+00> : vector<64x32xf32>
      %24 = tpu.matmul %18, %23, %cst_16 {dimension_numbers = #tpu.dot_dimension_numbers<[1], [0], [0], [1], [0, 0, 1, 1], [], []>} : vector<64x32xbf16>, vector<32x32xbf16>, vector<64x32xf32> -> vector<64x32xf32>
      %25 = arith.addf %22, %24 : vector<64x32xf32>
      %c0_17 = arith.constant 0 : index
      %c0_18 = arith.constant 0 : index
      %26 = vector.load %arg6[%c0_17, %c0_18] : memref<1x32xf32, #tpu.memory_space<vmem>>, vector<1x32xf32>
      %27 = vector.broadcast %26 : vector<1x32xf32> to vector<64x32xf32>
      %28 = arith.addf %25, %27 : vector<64x32xf32>
      %cst_19 = arith.constant 0.000000e+00 : f32
      %29 = vector.broadcast %cst_19 : f32 to vector<64x32xf32>
      %30 = arith.maximumf %28, %29 : vector<64x32xf32>
      %31 = arith.truncf %30 : vector<64x32xf32> to vector<64x32xbf16>
      %c0_20 = arith.constant 0 : index
      %c0_21 = arith.constant 0 : index
      %32 = vector.load %arg7[%c0_20, %c0_21] : memref<32x4xbf16, #tpu.memory_space<vmem>>, vector<32x4xbf16>
      %cst_22 = arith.constant dense<0.000000e+00> : vector<64x4xf32>
      %33 = tpu.matmul %18, %32, %cst_22 {dimension_numbers = #tpu.dot_dimension_numbers<[1], [0], [0], [1], [0, 0, 1, 1], [], []>} : vector<64x32xbf16>, vector<32x4xbf16>, vector<64x4xf32> -> vector<64x4xf32>
      %c0_23 = arith.constant 0 : index
      %c0_24 = arith.constant 0 : index
      %34 = vector.load %arg8[%c0_23, %c0_24] : memref<32x4xbf16, #tpu.memory_space<vmem>>, vector<32x4xbf16>
      %cst_25 = arith.constant dense<0.000000e+00> : vector<64x4xf32>
      %35 = tpu.matmul %31, %34, %cst_25 {dimension_numbers = #tpu.dot_dimension_numbers<[1], [0], [0], [1], [0, 0, 1, 1], [], []>} : vector<64x32xbf16>, vector<32x4xbf16>, vector<64x4xf32> -> vector<64x4xf32>
      %36 = arith.addf %33, %35 : vector<64x4xf32>
      %c0_26 = arith.constant 0 : index
      %c0_27 = arith.constant 0 : index
      %37 = vector.load %arg9[%c0_26, %c0_27] : memref<1x4xf32, #tpu.memory_space<vmem>>, vector<1x4xf32>
      %38 = vector.broadcast %37 : vector<1x4xf32> to vector<64x4xf32>
      %39 = arith.addf %36, %38 : vector<64x4xf32>
      %c0_28 = arith.constant 0 : index
      %c0_29 = arith.constant 0 : index
      %40 = vector.load %arg10[%c0_28, %c0_29] : memref<64x4xf32, #tpu.memory_space<vmem>>, vector<64x4xf32>
      tpu.vector_store %arg10[%c0_28, %c0_29], %39 {strides = array<i32>} : memref<64x4xf32, #tpu.memory_space<vmem>>, vector<64x4xf32>,
    } else {
    }
    return
  }
  func.func @transform_0(%arg0: i32, %arg1: i32) -> (i32, i32) {
    %c0_i32 = arith.constant 0 : i32
    return %arg0, %arg1 : i32, i32
  }
  func.func @transform_1(%arg0: i32, %arg1: i32) -> (i32, i32) {
    %c0_i32 = arith.constant 0 : i32
    %c0_i32_0 = arith.constant 0 : i32
    %c0_i32_1 = arith.constant 0 : i32
    return %c0_i32, %c0_i32_0 : i32, i32
  }
  func.func @transform_2(%arg0: i32, %arg1: i32) -> (i32, i32) {
    %c0_i32 = arith.constant 0 : i32
    %c0_i32_0 = arith.constant 0 : i32
    %c0_i32_1 = arith.constant 0 : i32
    return %c0_i32, %c0_i32_0 : i32, i32
  }
  func.func @transform_3(%arg0: i32, %arg1: i32) -> (i32, i32) {
    %c0_i32 = arith.constant 0 : i32
    %c0_i32_0 = arith.constant 0 : i32
    %c0_i32_1 = arith.constant 0 : i32
    return %c0_i32, %c0_i32_0 : i32, i32
  }
  func.func @transform_4(%arg0: i32, %arg1: i32) -> (i32, i32) {
    %c0_i32 = arith.constant 0 : i32
    %c0_i32_0 = arith.constant 0 : i32
    %c0_i32_1 = arith.constant 0 : i32
    return %c0_i32, %c0_i32_0 : i32, i32
  }
  func.func @transform_5(%arg0: i32, %arg1: i32) -> (i32, i32) {
    %c0_i32 = arith.constant 0 : i32
    %c0_i32_0 = arith.constant 0 : i32
    %c0_i32_1 = arith.constant 0 : i32
    return %c0_i32, %c0_i32_0 : i32, i32
  }
  func.func @transform_6(%arg0: i32, %arg1: i32) -> (i32, i32) {
    %c0_i32 = arith.constant 0 : i32
    %c0_i32_0 = arith.constant 0 : i32
    %c0_i32_1 = arith.constant 0 : i32
    return %c0_i32, %c0_i32_0 : i32, i32
  }
  func.func @transform_7(%arg0: i32, %arg1: i32) -> (i32, i32) {
    %c0_i32 = arith.constant 0 : i32
    %c0_i32_0 = arith.constant 0 : i32
    %c0_i32_1 = arith.constant 0 : i32
    return %c0_i32, %c0_i32_0 : i32, i32
  }
  func.func @transform_8(%arg0: i32, %arg1: i32) -> (i32, i32) {
    %c0_i32 = arith.constant 0 : i32
    %c0_i32_0 = arith.constant 0 : i32
    return %arg0, %c0_i32 : i32, i32
  }
}

</mosaic_0001>

<llo_original>
// kernel: net_forward.2
$region0: #{net_forward.2}
  #allocation0 [shape = 'u32[]', space=smem, size = 0x4, offset = 0x4, fixed_abs, tag = 'smem constant byte address 0x4 - core index']
  #allocation1 [shape = 'u32[144,128]{1,0:T(1,128)}', space=vmem, size = 0x12000, scoped, tag = 'internal scratch']
  #allocation2 [shape = 'f32[64,4]{1,0:T(8,128)}', space=vmem, size = 0x8000, scoped, tag = 'scratch operand']
  %s0 = inlined_call_operand.vmem [shape: bf16[256,256], index: 0, kind: input, shape index: {}]
  %s1 = inlined_call_operand.vmem [shape: bf16[256,4], index: 1, kind: input, shape index: {}]
  %s2 = inlined_call_operand.vmem [shape: bf16[4,32], index: 2, kind: input, shape index: {}]
  %s3 = inlined_call_operand.vmem [shape: bf16[4,32], index: 3, kind: input, shape index: {}]
  %s4 = inlined_call_operand.vmem [shape: f32[1,32], index: 4, kind: input, shape index: {}]
  %s5 = inlined_call_operand.vmem [shape: bf16[256,32], index: 5, kind: output, shape index: {}]
  %s6 = sld [smem:[#allocation0]]
  $region102: #{net_forward.2} parent=0
    _
  %s8 = ssub.s32 1, %s6
  %s9 = scalar_select 0, %s8, %s6
  $region1: #{net_forward.2} parent=0
    #allocation3 [shape = 'u8[32768]{0}', space=vmem, size = 0x8000, scoped, tag = 'input window, operand 0']
    loop: start=0, step=1, limit=10
    $region2: #{net_forward.2} parent=1 // loop_pre_header
      _
    $region3: #{net_forward.2} parent=1 // loop_header
      %s11 = sphi 0, %s15
      %p12 = scmp.ge.s32.totalorder %s11, 10
      %s18 = sphi 0, %s30
      %s19 = sphi 0, %s26
      %s20 = sphi 0, %s18
      %s21 = sphi 0, %s19
      %s22 = sphi 0, %s20
      %s23 = sphi 0, %s21
      %s35 = sphi 0, %s37
      %s38 = sphi 0, %s35
      %s39 = sphi 0, %s38
      %s55 = sphi 0, %s39
      %s59 = sphi 0, %s59
      %s61 = sphi 0, %s59
      %s62 = sphi 0, %s61
      %s76 = sphi 0, %s62
      %s80 = sphi 0, %s80
      %s82 = sphi 0, %s80
      %s83 = sphi 0, %s82
      %s97 = sphi 0, %s83
      %s101 = sphi 0, %s101
      %s103 = sphi 0, %s101
      %s104 = sphi 0, %s103
      %s118 = sphi 0, %s104
      %s122 = sphi 0, %s122
      %s124 = sphi 0, %s122
      %s125 = sphi 0, %s124
      %s139 = sphi 0, %s125
      %s145 = sphi 0, %s147
      %s148 = sphi 0, %s145
      %s149 = sphi 0, %s148
      %s165 = sphi 0, %s149
    $region4: #{net_forward.2} parent=1 // loop_header_branch
      %14 = sbr.rel (%p12) target = $region8
    $region5: #{net_forward.2} parent=1 // loop_body
      %s16 = ssub.s32 %s11, 1
      %s17 = ssub.s32 %s11, 2
      %s24 = sadd.s32 1, %s19
      %p25 = scmp.ge.s32.totalorder %s24, 2
      %s26 = scalar_select %p25, 0, %s24
      %s27 = sadd.s32 1, %s18
      %s28 = scalar_select %p25, %s27, %s18
      %p29 = scmp.ge.s32.totalorder %s28, 4
      %s30 = scalar_select %p29, 0, %s28
      %s31 = ssub.s32 %s18, %s30
      %s32 = ssub.s32 %s19, %s26
      %s33 = sor.u32 %s31, %s32
      %p34 = scmp.eq.s32.totalorder %s33, 0
      %s36 = sadd.s32 %s35, 1
      %s37 = scalar_select %p34, %s35, %s36
      %p40 = pneg %p34
      %p41 = scmp.eq.s32.totalorder %s11, 7
      %p42 = por %p40, %p41
      %p43 = scmp.ne.s32.totalorder %s35, %s38
      %p44 = scmp.eq.s32.totalorder %s11, 0
      %p45 = por %p43, %p44
      %p46 = scmp.ne.s32.totalorder %s35, %s38
      %p47 = scmp.eq.s32.totalorder %s16, 7
      %p48 = por %p46, %p47
      %p49 = scmp.ne.s32.totalorder %s38, %s39
      %p50 = scmp.eq.s32.totalorder %s16, 0
      %p51 = por %p49, %p50
      %p52 = scmp.ne.s32.totalorder %s38, %s39
      %p53 = scmp.eq.s32.totalorder %s17, 7
      %p54 = por %p52, %p53
      %p56 = scmp.ne.s32.totalorder %s39, %s55
      %p57 = scmp.eq.s32.totalorder %s17, 0
      %p58 = por %p56, %p57
      %s60 = sadd.s32 %s59, 1
      %p63 = scmp.eq.s32.totalorder %s11, 7
      %p64 = scmp.ne.s32.totalorder %s59, %s61
      %p65 = scmp.eq.s32.totalorder %s11, 0
      %p66 = por %p64, %p65
      %p67 = scmp.ne.s32.totalorder %s59, %s61
      %p68 = scmp.eq.s32.totalorder %s16, 7
      %p69 = por %p67, %p68
      %p70 = scmp.ne.s32.totalorder %s61, %s62
      %p71 = scmp.eq.s32.totalorder %s16, 0
      %p72 = por %p70, %p71
      %p73 = scmp.ne.s32.totalorder %s61, %s62
      %p74 = scmp.eq.s32.totalorder %s17, 7
      %p75 = por %p73, %p74
      %p77 = scmp.ne.s32.totalorder %s62, %s76
      %p78 = scmp.eq.s32.totalorder %s17, 0
      %p79 = por %p77, %p78
      %s81 = sadd.s32 %s80, 1
      %p84 = scmp.eq.s32.totalorder %s11, 7
      %p85 = scmp.ne.s32.totalorder %s80, %s82
      %p86 = scmp.eq.s32.totalorder %s11, 0
      %p87 = por %p85, %p86
      %p88 = scmp.ne.s32.totalorder %s80, %s82
      %p89 = scmp.eq.s32.totalorder %s16, 7
      %p90 = por %p88, %p89
      %p91 = scmp.ne.s32.totalorder %s82, %s83
      %p92 = scmp.eq.s32.totalorder %s16, 0
      %p93 = por %p91, %p92
      %p94 = scmp.ne.s32.totalorder %s82, %s83
      %p95 = scmp.eq.s32.totalorder %s17, 7
      %p96 = por %p94, %p95
      %p98 = scmp.ne.s32.totalorder %s83, %s97
      %p99 = scmp.eq.s32.totalorder %s17, 0
      %p100 = por %p98, %p99
      %s102 = sadd.s32 %s101, 1
      %p105 = scmp.eq.s32.totalorder %s11, 7
      %p106 = scmp.ne.s32.totalorder %s101, %s103
      %p107 = scmp.eq.s32.totalorder %s11, 0
      %p108 = por %p106, %p107
      %p109 = scmp.ne.s32.totalorder %s101, %s103
      %p110 = scmp.eq.s32.totalorder %s16, 7
      %p111 = por %p109, %p110
      %p112 = scmp.ne.s32.totalorder %s103, %s104
      %p113 = scmp.eq.s32.totalorder %s16, 0
      %p114 = por %p112, %p113
      %p115 = scmp.ne.s32.totalorder %s103, %s104
      %p116 = scmp.eq.s32.totalorder %s17, 7
      %p117 = por %p115, %p116
      %p119 = scmp.ne.s32.totalorder %s104, %s118
      %p120 = scmp.eq.s32.totalorder %s17, 0
      %p121 = por %p119, %p120
      %s123 = sadd.s32 %s122, 1
      %p126 = scmp.eq.s32.totalorder %s11, 7
      %p127 = scmp.ne.s32.totalorder %s122, %s124
      %p128 = scmp.eq.s32.totalorder %s11, 0
      %p129 = por %p127, %p128
      %p130 = scmp.ne.s32.totalorder %s122, %s124
      %p131 = scmp.eq.s32.totalorder %s16, 7
      %p132 = por %p130, %p131
      %p133 = scmp.ne.s32.totalorder %s124, %s125
      %p134 = scmp.eq.s32.totalorder %s16, 0
      %p135 = por %p133, %p134
      %p136 = scmp.ne.s32.totalorder %s124, %s125
      %p137 = scmp.eq.s32.totalorder %s17, 7
      %p138 = por %p136, %p137
      %p140 = scmp.ne.s32.totalorder %s125, %s139
      %p141 = scmp.eq.s32.totalorder %s17, 0
      %p142 = por %p140, %p141
      %s143 = ssub.s32 %s18, %s30
      %p144 = scmp.eq.s32.totalorder %s143, 0
      %s146 = sadd.s32 %s145, 1
      %s147 = scalar_select %p144, %s145, %s146
      %p150 = pneg %p144
      %p151 = scmp.eq.s32.totalorder %s11, 7
      %p152 = por %p150, %p151
      %p153 = scmp.ne.s32.totalorder %s145, %s148
      %p154 = scmp.eq.s32.totalorder %s11, 0
      %p155 = por %p153, %p154
      %p156 = scmp.ne.s32.totalorder %s145, %s148
      %p157 = scmp.eq.s32.totalorder %s16, 7
      %p158 = por %p156, %p157
      %p159 = scmp.ne.s32.totalorder %s148, %s149
      %p160 = scmp.eq.s32.totalorder %s16, 0
      %p161 = por %p159, %p160
      %p162 = scmp.ne.s32.totalorder %s148, %s149
      %p163 = scmp.eq.s32.totalorder %s17, 7
      %p164 = por %p162, %p163
      %p166 = scmp.ne.s32.totalorder %s149, %s165
      %p167 = scmp.eq.s32.totalorder %s17, 0
      %p168 = por %p166, %p167
      %p169 = scmp.le.s32.totalorder 1, %s11
      %p170 = scmp.lt.s32.totalorder %s11, 9
      %p171 = pnand %p169, %p170
      %p172 = pneg %p171
      // Predicated region
      $region9: #{net_forward.2} parent=5 // pred_check
        _
      $region10: #{net_forward.2} parent=5 // pred_check_branch
        %174 = sbr.rel (%p171) target = $region12
      $region11: #{net_forward.2} parent=5 // pred_region
        %s175 = ssub.s32 %s11, 1
        // Predicated region
        $region13: #{net_forward.2} parent=11 // pred_check
          %p176 = pneg %p72
        $region14: #{net_forward.2} parent=11 // pred_check_branch
          %178 = sbr.rel (%p176) target = $region16
        $region15: #{net_forward.2} parent=11 // pred_region
          _
        $region16: #{net_forward.2} parent=11 // pred_fallthru
          _
        // Predicated region
        $region17: #{net_forward.2} parent=11 // pred_check
          %p179 = pneg %p93
        $region18: #{net_forward.2} parent=11 // pred_check_branch
          %181 = sbr.rel (%p179) target = $region20
        $region19: #{net_forward.2} parent=11 // pred_region
          _
        $region20: #{net_forward.2} parent=11 // pred_fallthru
          _
        // Predicated region
        $region21: #{net_forward.2} parent=11 // pred_check
          %p182 = pneg %p114
        $region22: #{net_forward.2} parent=11 // pred_check_branch
          %184 = sbr.rel (%p182) target = $region24
        $region23: #{net_forward.2} parent=11 // pred_region
          _
        $region24: #{net_forward.2} parent=11 // pred_fallthru
          _
        // Predicated region
        $region25: #{net_forward.2} parent=11 // pred_check
          %p185 = pneg %p135
        $region26: #{net_forward.2} parent=11 // pred_check_branch
          %187 = sbr.rel (%p185) target = $region28
        $region27: #{net_forward.2} parent=11 // pred_region
          _
        $region28: #{net_forward.2} parent=11 // pred_fallthru
          _
      $region12: #{net_forward.2} parent=5 // pred_fallthru
        _
      %p188 = scmp.lt.s32.totalorder %s11, 8
      // Predicated region
      $region29: #{net_forward.2} parent=5 // pred_check
        %p189 = pneg %p188
      $region30: #{net_forward.2} parent=5 // pred_check_branch
        %191 = sbr.rel (%p189) target = $region32
      $region31: #{net_forward.2} parent=5 // pred_region
        // Predicated region
        $region33: #{net_forward.2} parent=31 // pred_check
          %p192 = pneg %p45
        $region34: #{net_forward.2} parent=31 // pred_check_branch
          %194 = sbr.rel (%p192) target = $region36
        $region35: #{net_forward.2} parent=31 // pred_region
          %s195 = sand.u32 %s35, 1
          %s196 = sand.u32 %s35, 1
          %s197 = smul.addr %s196, 32
          %s198 = scalar_lea.vmem [#allocation3], %s197
          %s199 = smul.u32 8, %s18
          %s200 = smul.addr %s199, 2
          %s201 = sadd.s32 %s19, %s200
          %s202 = smul.addr %s201, 4
          %s203 = scalar_lea.vmem %s0, %s202
          // Predicated region
          $region37: #{net_forward.2} parent=35 // pred_check
            _
          $region38: #{net_forward.2} parent=35 // pred_check_branch
            %205 = sbr.rel (0) target = $region40
          $region39: #{net_forward.2} parent=35 // pred_region
            // Predicated region
            $region41: #{net_forward.2} parent=39 // pred_check
              _
            $region42: #{net_forward.2} parent=39 // pred_check_branch
              %207 = sbr.rel target = $region44
            $region43: #{net_forward.2} parent=39 // pred_region
              // Predicated region
              $region56: #{net_forward.2} parent=43 // pred_check
                _
              $region57: #{net_forward.2} parent=43 // pred_check_branch
                %236 = sbr.rel (0) target = $region59
              $region58: #{net_forward.2} parent=43 // pred_region
                loop: start=0, step=1, limit=1
                $region60: #{net_forward.2} parent=58 // loop_pre_header
                  _
                $region61: #{net_forward.2} parent=58 // loop_header
                  %s238 = sphi 0, %s242
                  %p239 = scmp.ge.s32.totalorder %s238, 1
                  %s243 = sphi %s203, %s203
                  %s244 = sphi %s198, %s198
                $region62: #{net_forward.2} parent=58 // loop_header_branch
                  %241 = sbr.rel (%p239) target = $region66
                $region63: #{net_forward.2} parent=58 // loop_body
                  _
                $region64: #{net_forward.2} parent=58 // loop_footer
                  %s242 = sadd.s32 1, %s238
                $region65: #{net_forward.2} parent=58 // loop_footer_branch
                  %237 = sbr.rel target = $region61
                $region66: #{net_forward.2} parent=58 // loop_exit
                  _
                loop: start=0, step=1, limit=1
                $region67: #{net_forward.2} parent=58 // loop_pre_header
                  _
                $region68: #{net_forward.2} parent=58 // loop_header
                  %s247 = sphi 0, %s251
                  %p248 = scmp.ge.s32.totalorder %s247, 1
                  %s252 = sphi %s203, %s203
                  %s253 = sphi %s198, %s198
                $region69: #{net_forward.2} parent=58 // loop_header_branch
                  %250 = sbr.rel (%p248) target = $region73
                $region70: #{net_forward.2} parent=58 // loop_body
                  %v254 = vld [vmem:[%s252] sm:$0xf]
                  %255 = vst [vmem:[%s253] sm:$0xf] %v254
                  %v256 = vld [vmem:[%s252 + $0x8] sm:$0xf]
                  %257 = vst [vmem:[%s253 + $0x4] sm:$0xf] %v256
                  %v258 = vld [vmem:[%s252 + $0x10] sm:$0xf]
                  %259 = vst [vmem:[%s253 + $0x8] sm:$0xf] %v258
                  %v260 = vld [vmem:[%s252 + $0x18] sm:$0xf]
                  %261 = vst [vmem:[%s253 + $0xc] sm:$0xf] %v260
                  %v262 = vld [vmem:[%s252 + $0x20] sm:$0xf]
                  %263 = vst [vmem:[%s253 + $0x10] sm:$0xf] %v262
                  %v264 = vld [vmem:[%s252 + $0x28] sm:$0xf]
                  %265 = vst [vmem:[%s253 + $0x14] sm:$0xf] %v264
                  %v266 = vld [vmem:[%s252 + $0x30] sm:$0xf]
                  %267 = vst [vmem:[%s253 + $0x18] sm:$0xf] %v266
                  %v268 = vld [vmem:[%s252 + $0x38] sm:$0xf]
                  %269 = vst [vmem:[%s253 + $0x1c] sm:$0xf] %v268
                $region71: #{net_forward.2} parent=58 // loop_footer
                  %s251 = sadd.s32 1, %s247
                $region72: #{net_forward.2} parent=58 // loop_footer_branch
                  %246 = sbr.rel target = $region68
                $region73: #{net_forward.2} parent=58 // loop_exit
                  _
              $region59: #{net_forward.2} parent=43 // pred_fallthru
                _
            $region44: #{net_forward.2} parent=39 // pred_fallthru
              _
            // Predicated region
            $region45: #{net_forward.2} parent=39 // pred_check
              _
            $region46: #{net_forward.2} parent=39 // pred_check_branch
              %209 = sbr.rel (0) target = $region48
            $region47: #{net_forward.2} parent=39 // pred_region
              loop: start=0, step=1, limit=1
              $region49: #{net_forward.2} parent=47 // loop_pre_header
                _
              $region50: #{net_forward.2} parent=47 // loop_header
                %s212 = sphi 0, %s216
                %p213 = scmp.ge.s32.totalorder %s212, 1
                %s217 = sphi %s203, %s203
                %s218 = sphi %s198, %s198
              $region51: #{net_forward.2} parent=47 // loop_header_branch
                %215 = sbr.rel (%p213) target = $region55
              $region52: #{net_forward.2} parent=47 // loop_body
                %v219 = vld [vmem:[%s217] sm:$0xf]
                %220 = vst [vmem:[%s218] sm:$0xf] %v219
                %v221 = vld [vmem:[%s217 + $0x8] sm:$0xf]
                %222 = vst [vmem:[%s218 + $0x4] sm:$0xf] %v221
                %v223 = vld [vmem:[%s217 + $0x10] sm:$0xf]
                %224 = vst [vmem:[%s218 + $0x8] sm:$0xf] %v223
                %v225 = vld [vmem:[%s217 + $0x18] sm:$0xf]
                %226 = vst [vmem:[%s218 + $0xc] sm:$0xf] %v225
                %v227 = vld [vmem:[%s217 + $0x20] sm:$0xf]
                %228 = vst [vmem:[%s218 + $0x10] sm:$0xf] %v227
                %v229 = vld [vmem:[%s217 + $0x28] sm:$0xf]
                %230 = vst [vmem:[%s218 + $0x14] sm:$0xf] %v229
                %v231 = vld [vmem:[%s217 + $0x30] sm:$0xf]
                %232 = vst [vmem:[%s218 + $0x18] sm:$0xf] %v231
                %v233 = vld [vmem:[%s217 + $0x38] sm:$0xf]
                %234 = vst [vmem:[%s218 + $0x1c] sm:$0xf] %v233
              $region53: #{net_forward.2} parent=47 // loop_footer
                %s216 = sadd.s32 1, %s212
              $region54: #{net_forward.2} parent=47 // loop_footer_branch
                %211 = sbr.rel target = $region50
              $region55: #{net_forward.2} parent=47 // loop_exit
                _
            $region48: #{net_forward.2} parent=39 // pred_fallthru
              _
          $region40: #{net_forward.2} parent=35 // pred_fallthru
            _
          %270 = vnop
        $region36: #{net_forward.2} parent=31 // pred_fallthru
          _
      $region32: #{net_forward.2} parent=5 // pred_fallthru
        _
      %p271 = scmp.le.s32.totalorder 1, %s11
      %p272 = scmp.lt.s32.totalorder %s11, 9
      %p273 = pnand %p271, %p272
      %p274 = pneg %p273
      // Predicated region
      $region74: #{net_forward.2} parent=5 // pred_check
        _
      $region75: #{net_forward.2} parent=5 // pred_check_branch
        %276 = sbr.rel (%p273) target = $region77
      $region76: #{net_forward.2} parent=5 // pred_region
        %s277 = ssub.s32 %s11, 1
        %s278 = sand.u32 %s38, 1
        %s279 = sand.u32 %s38, 1
        %s280 = smul.addr %s279, 32
        %s281 = scalar_lea.vmem [#allocation3], %s280
        // Predicated region
        $region78: #{net_forward.2} parent=76 // pred_check
          %p282 = pneg %p51
        $region79: #{net_forward.2} parent=76 // pred_check_branch
          %284 = sbr.rel (%p282) target = $region81
        $region80: #{net_forward.2} parent=76 // pred_region
          _
        $region81: #{net_forward.2} parent=76 // pred_fallthru
          _
        %s285 = sand.u32 %s38, 1
        %s286 = sand.u32 %s38, 1
        %s287 = smul.addr %s286, 32
        %s288 = scalar_lea.vmem [#allocation3], %s287
        %p289 = pneg %p51
        %p290 = pneg %p48
        %p291 = pneg %p72
        %p292 = pneg %p69
        %p293 = pneg %p93
        %p294 = pneg %p90
        %p295 = pneg %p114
        %p296 = pneg %p111
        %p297 = pneg %p135
        %p298 = pneg %p132
        %p299 = pneg %p161
        %p300 = pneg %p158
        %s301 = smul.u32 8, %s20
        %p302 = scmp.lt.s32.totalorder %s301, 31
        %s303 = scalar_select %p302, %s301, 31
        %s304 = smul.addr %s303, 4
        %s305 = scalar_lea.vmem %s5, %s304
        %s306 = smul.u32 8, %s20
        %s307 = smul.u32 8, %s20
        %p308 = scmp.lt.s32.totalorder %s307, 31
        %s309 = scalar_select %p308, %s307, 31
        %s310 = smul.addr %s309, 4
        %s311 = scalar_lea.vmem %s5, %s310
        %s312 = smul.u32 8, %s20
        %p314 = scmp.eq.s32.totalorder %s21, 0
        // Predicated region
        $region82: #{net_forward.2} parent=76 // pred_check
          %p315 = pneg %p314
        $region83: #{net_forward.2} parent=76 // pred_check_branch
          %317 = sbr.rel (%p315) target = $region85
        $region84: #{net_forward.2} parent=76 // pred_region
          %vm318 = vcmask 31744
          %319 = vst.msk [vmem:[#allocation2] sm:$0xff] %vm318, 0.0
          %320 = vst.msk [vmem:[#allocation2 + $0x8] sm:$0xff] %vm318, 0.0
          %321 = vst.msk [vmem:[#allocation2 + $0x10] sm:$0xff] %vm318, 0.0
          %322 = vst.msk [vmem:[#allocation2 + $0x18] sm:$0xff] %vm318, 0.0
          %323 = vst.msk [vmem:[#allocation2 + $0x20] sm:$0xff] %vm318, 0.0
          %324 = vst.msk [vmem:[#allocation2 + $0x28] sm:$0xff] %vm318, 0.0
          %325 = vst.msk [vmem:[#allocation2 + $0x30] sm:$0xff] %vm318, 0.0
          %326 = vst.msk [vmem:[#allocation2 + $0x38] sm:$0xff] %vm318, 0.0
        $region85: #{net_forward.2} parent=76 // pred_fallthru
          _
        %s327 = smul.u32 %s21, 128
        %s328 = sshra.s32 %s327, 3
        %s329 = sand.u32 %s327, 7
        %s330 = smul.addr %s328, 4
        %s331 = scalar_lea.vmem %s1, %s330
        %v332 = vld [vmem:[%s331] sm:$0xf]
        %v333 = vld [vmem:[%s331 + $0x4] sm:$0xf]
        %v334 = vld [vmem:[%s331 + $0x8] sm:$0xf]
        %v335 = vld [vmem:[%s331 + $0xc] sm:$0xf]
        %v336 = vld [vmem:[%s331 + $0x10] sm:$0xf]
        %v337 = vld [vmem:[%s331 + $0x14] sm:$0xf]
        %v338 = vld [vmem:[%s331 + $0x18] sm:$0xf]
        %v339 = vld [vmem:[%s331 + $0x1c] sm:$0xf]
        %v340 = vld [vmem:[%s331 + $0x20] sm:$0xf]
        %v341 = vld [vmem:[%s331 + $0x24] sm:$0xf]
        %v342 = vld [vmem:[%s331 + $0x28] sm:$0xf]
        %v343 = vld [vmem:[%s331 + $0x2c] sm:$0xf]
        %v344 = vld [vmem:[%s331 + $0x30] sm:$0xf]
        %v345 = vld [vmem:[%s331 + $0x34] sm:$0xf]
        %v346 = vld [vmem:[%s331 + $0x38] sm:$0xf]
        %v347 = vld [vmem:[%s331 + $0x3c] sm:$0xf]
        %v348 = vld [vmem:[#allocation2] sm:$0xff]
        %v349 = vld [vmem:[#allocation2 + $0x8] sm:$0xff]
        %v350 = vld [vmem:[#allocation2 + $0x10] sm:$0xff]
        %v351 = vld [vmem:[#allocation2 + $0x18] sm:$0xff]
        %v352 = vld [vmem:[#allocation2 + $0x20] sm:$0xff]
        %v353 = vld [vmem:[#allocation2 + $0x28] sm:$0xff]
        %v354 = vld [vmem:[#allocation2 + $0x30] sm:$0xff]
        %v355 = vld [vmem:[#allocation2 + $0x38] sm:$0xff]
        %v356 = vld [vmem:[%s281] sm:$0xf]
        %v357 = vld [vmem:[%s281 + $0x4] sm:$0xf]
        %v358 = vld [vmem:[%s281 + $0x8] sm:$0xf]
        %v359 = vld [vmem:[%s281 + $0xc] sm:$0xf]
        %v360 = vld [vmem:[%s281 + $0x10] sm:$0xf]
        %v361 = vld [vmem:[%s281 + $0x14] sm:$0xf]
        %v362 = vld [vmem:[%s281 + $0x18] sm:$0xf]
        %v363 = vld [vmem:[%s281 + $0x1c] sm:$0xf]
        %v372 = vunpack.c.l.b16 %v356
        %v373 = vunpack.c.l.b16 %v357
        %v374 = vunpack.c.l.b16 %v358
        %v375 = vunpack.c.l.b16 %v359
        %v376 = vunpack.c.l.b16 %v360
        %v377 = vunpack.c.l.b16 %v361
        %v378 = vunpack.c.l.b16 %v362
        %v379 = vunpack.c.l.b16 %v363
        %v380 = vpack.c.b16 %v373, %v372
        %v381 = vpack.c.b16 %v375, %v374
        %v382 = vpack.c.b16 %v377, %v376
        %v383 = vpack.c.b16 %v379, %v378
        %v404 = vunpack.c.l.b16 %v332
        %v405 = vunpack.c.l.b16 %v333
        %v406 = vunpack.c.l.b16 %v334
        %v407 = vunpack.c.l.b16 %v335
        %v408 = vunpack.c.l.b16 %v336
        %v409 = vunpack.c.l.b16 %v337
        %v410 = vunpack.c.l.b16 %v338
        %v411 = vunpack.c.l.b16 %v339
        %v412 = vunpack.c.l.b16 %v340
        %v413 = vunpack.c.l.b16 %v341
        %v414 = vunpack.c.l.b16 %v342
        %v415 = vunpack.c.l.b16 %v343
        %v416 = vunpack.c.l.b16 %v344
        %v417 = vunpack.c.l.b16 %v345
        %v418 = vunpack.c.l.b16 %v346
        %v419 = vunpack.c.l.b16 %v347
        %v420 = vpack.c.b16 %v405, %v404
        %v421 = vpack.c.b16 %v407, %v406
        %v422 = vpack.c.b16 %v409, %v408
        %v423 = vpack.c.b16 %v411, %v410
        %v424 = vpack.c.b16 %v413, %v412
        %v425 = vpack.c.b16 %v415, %v414
        %v426 = vpack.c.b16 %v417, %v416
        %v427 = vpack.c.b16 %v419, %v418
        %436 = vmatprep.subr.bf16.mxu0 0
        %437 = vmatpush1.bf16.msra.mxu0 %v420
        %438 = vmatprep.subr.bf16.mxu0 0
        %439 = vmatpush1.bf16.msra.mxu0 %v421
        %440 = vmatprep.subr.bf16.mxu0 0
        %441 = vmatpush1.bf16.msra.mxu0 %v422
        %442 = vmatprep.subr.bf16.mxu0 0
        %443 = vmatpush1.bf16.msra.mxu0 %v423
        %444 = vmatprep.subr.bf16.mxu0 0
        %445 = vmatpush1.bf16.msra.mxu0 %v424
        %446 = vmatprep.subr.bf16.mxu0 0
        %447 = vmatpush1.bf16.msra.mxu0 %v425
        %448 = vmatprep.subr.bf16.mxu0 0
        %449 = vmatpush1.bf16.msra.mxu0 %v426
        %450 = vmatprep.subr.bf16.mxu0 0
        %451 = vmatpush1.bf16.msra.mxu0 %v427
        %452 = vmatprep.subr.bf16.mxu0 0
        %453 = vmatpush1.bf16.msra.mxu0 0
        %454 = vmatprep.subr.bf16.mxu0 0
        %455 = vmatpush1.bf16.msra.mxu0 0
        %456 = vmatprep.subr.bf16.mxu0 0
        %457 = vmatpush1.bf16.msra.mxu0 0
        %458 = vmatprep.subr.bf16.mxu0 0
        %459 = vmatpush1.bf16.msra.mxu0 0
        %460 = vmatprep.subr.bf16.mxu0 0
        %461 = vmatpush1.bf16.msra.mxu0 0
        %462 = vmatprep.subr.bf16.mxu0 0
        %463 = vmatpush1.bf16.msra.mxu0 0
        %464 = vmatprep.subr.bf16.mxu0 0
        %465 = vmatpush1.bf16.msra.mxu0 0
        %466 = vmatprep.subr.bf16.mxu0 0
        %467 = vmatpush1.bf16.msra.mxu0 0
        %468 = vmatprep.mubr.bf16.mxu0 0
        %469 = vmatmul.mubr.bf16.gmra.mrb[0].mxu0 %v380
        %v470 = vpop.f32.mrb[0].mxu0
        %v471 = vadd.f32 0.0, %v470
        %v472 = vpop.f32.mrb[0].mxu0
        %v473 = vpop.f32.mrb[0].mxu0
        %v474 = vadd.f32 0.0, %v473
        %v475 = vpop.f32.mrb[0].mxu0
        %476 = vmatprep.mubr.bf16.mxu0 0
        %477 = vmatmul.mubr.bf16.gmra.mrb[0].mxu0 %v381
        %v478 = vpop.f32.mrb[0].mxu0
        %v479 = vadd.f32 0.0, %v478
        %v480 = vpop.f32.mrb[0].mxu0
        %v481 = vpop.f32.mrb[0].mxu0
        %v482 = vadd.f32 0.0, %v481
        %v483 = vpop.f32.mrb[0].mxu0
        %484 = vmatprep.mubr.bf16.mxu0 0
        %485 = vmatmul.mubr.bf16.gmra.mrb[0].mxu0 %v382
        %v486 = vpop.f32.mrb[0].mxu0
        %v487 = vadd.f32 0.0, %v486
        %v488 = vpop.f32.mrb[0].mxu0
        %v489 = vpop.f32.mrb[0].mxu0
        %v490 = vadd.f32 0.0, %v489
        %v491 = vpop.f32.mrb[0].mxu0
        %492 = vmatprep.mubr.bf16.mxu0 0
        %493 = vmatmul.mubr.bf16.gmra.mrb[0].mxu0 %v383
        %v494 = vpop.f32.mrb[0].mxu0
        %v495 = vadd.f32 0.0, %v494
        %v496 = vpop.f32.mrb[0].mxu0
        %v497 = vpop.f32.mrb[0].mxu0
        %v498 = vadd.f32 0.0, %v497
        %v499 = vpop.f32.mrb[0].mxu0
        %500 = vdwg.mxu0
        %v501 = vadd.f32 %v348, %v471
        %v502 = vadd.f32 %v349, %v474
        %v503 = vadd.f32 %v350, %v479
        %v504 = vadd.f32 %v351, %v482
        %v505 = vadd.f32 %v352, %v487
        %v506 = vadd.f32 %v353, %v490
        %v507 = vadd.f32 %v354, %v495
        %v508 = vadd.f32 %v355, %v498
        %vm509 = vcmask 31744
        %510 = vst.msk [vmem:[#allocation2] sm:$0xff] %vm509, %v501
        %511 = vst.msk [vmem:[#allocation2 + $0x8] sm:$0xff] %vm509, %v502
        %512 = vst.msk [vmem:[#allocation2 + $0x10] sm:$0xff] %vm509, %v503
        %513 = vst.msk [vmem:[#allocation2 + $0x18] sm:$0xff] %vm509, %v504
        %514 = vst.msk [vmem:[#allocation2 + $0x20] sm:$0xff] %vm509, %v505
        %515 = vst.msk [vmem:[#allocation2 + $0x28] sm:$0xff] %vm509, %v506
        %516 = vst.msk [vmem:[#allocation2 + $0x30] sm:$0xff] %vm509, %v507
        %517 = vst.msk [vmem:[#allocation2 + $0x38] sm:$0xff] %vm509, %v508
        %p518 = scmp.eq.s32.totalorder %s21, 1
        // Predicated region
        $region86: #{net_forward.2} parent=76 // pred_check
          %p519 = pneg %p518
        $region87: #{net_forward.2} parent=76 // pred_check_branch
          %521 = sbr.rel (%p519) target = $region89
        $region88: #{net_forward.2} parent=76 // pred_region
          %s522 = smul.u32 %s20, 64
          %s523 = sshra.s32 %s522, 3
          %s524 = sand.u32 %s522, 7
          %s525 = smul.addr %s523, 4
          %s526 = scalar_lea.vmem %s1, %s525
          %v527 = vld [vmem:[%s526] sm:$0xf]
          %v528 = vld [vmem:[%s526 + $0x4] sm:$0xf]
          %v529 = vld [vmem:[%s526 + $0x8] sm:$0xf]
          %v530 = vld [vmem:[%s526 + $0xc] sm:$0xf]
          %v531 = vld [vmem:[%s526 + $0x10] sm:$0xf]
          %v532 = vld [vmem:[%s526 + $0x14] sm:$0xf]
          %v533 = vld [vmem:[%s526 + $0x18] sm:$0xf]
          %v534 = vld [vmem:[%s526 + $0x1c] sm:$0xf]
          %v535 = vld [vmem:[#allocation2] sm:$0xff]
          %v536 = vld [vmem:[#allocation2 + $0x8] sm:$0xff]
          %v537 = vld [vmem:[#allocation2 + $0x10] sm:$0xff]
          %v538 = vld [vmem:[#allocation2 + $0x18] sm:$0xff]
          %v539 = vld [vmem:[#allocation2 + $0x20] sm:$0xff]
          %v540 = vld [vmem:[#allocation2 + $0x28] sm:$0xff]
          %v541 = vld [vmem:[#allocation2 + $0x30] sm:$0xff]
          %v542 = vld [vmem:[#allocation2 + $0x38] sm:$0xff]
          %v543 = vpack.c.bf16 %v536, %v535
          %v544 = vpack.c.bf16 %v538, %v537
          %v545 = vpack.c.bf16 %v540, %v539
          %v546 = vpack.c.bf16 %v542, %v541
          %v547 = vld [vmem:[%s2] sm:$0x3]
          %v548 = vld [vmem:[%s3] sm:$0x3]
          %v557 = vunpack.c.l.b16 %v527
          %v558 = vunpack.c.l.b16 %v528
          %v559 = vunpack.c.l.b16 %v529
          %v560 = vunpack.c.l.b16 %v530
          %v561 = vunpack.c.l.b16 %v531
          %v562 = vunpack.c.l.b16 %v532
          %v563 = vunpack.c.l.b16 %v533
          %v564 = vunpack.c.l.b16 %v534
          %v565 = vpack.c.b16 %v558, %v557
          %v566 = vpack.c.b16 %v560, %v559
          %v567 = vpack.c.b16 %v562, %v561
          %v568 = vpack.c.b16 %v564, %v563
          %v570 = vsel %vm509, %v565, 0
          %v573 = vsel %vm509, %v566, 0
          %v576 = vsel %vm509, %v567, 0
          %v579 = vsel %vm509, %v568, 0
          %vm581 = vcmask 1041408
          %v583 = vsel %vm581, %v548, 0
          %585 = vmatprep.subr.bf16.mxu0 0
          %586 = vmatpush1.bf16.msra.mxu0 %v583
          %587 = vmatprep.subr.bf16.mxu0 0
          %588 = vmatpush1.bf16.msra.mxu0 0
          %589 = vmatprep.subr.bf16.mxu0 0
          %590 = vmatpush1.bf16.msra.mxu0 0
          %591 = vmatprep.subr.bf16.mxu0 0
          %592 = vmatpush1.bf16.msra.mxu0 0
          %593 = vmatprep.subr.bf16.mxu0 0
          %594 = vmatpush1.bf16.msra.mxu0 0
          %595 = vmatprep.subr.bf16.mxu0 0
          %596 = vmatpush1.bf16.msra.mxu0 0
          %597 = vmatprep.subr.bf16.mxu0 0
          %598 = vmatpush1.bf16.msra.mxu0 0
          %599 = vmatprep.subr.bf16.mxu0 0
          %600 = vmatpush1.bf16.msra.mxu0 0
          %601 = vmatprep.subr.bf16.mxu0 0
          %602 = vmatpush1.bf16.msra.mxu0 0
          %603 = vmatprep.subr.bf16.mxu0 0
          %604 = vmatpush1.bf16.msra.mxu0 0
          %605 = vmatprep.subr.bf16.mxu0 0
          %606 = vmatpush1.bf16.msra.mxu0 0
          %607 = vmatprep.subr.bf16.mxu0 0
          %608 = vmatpush1.bf16.msra.mxu0 0
          %609 = vmatprep.subr.bf16.mxu0 0
          %610 = vmatpush1.bf16.msra.mxu0 0
          %611 = vmatprep.subr.bf16.mxu0 0
          %612 = vmatpush1.bf16.msra.mxu0 0
          %613 = vmatprep.subr.bf16.mxu0 0
          %614 = vmatpush1.bf16.msra.mxu0 0
          %615 = vmatprep.subr.bf16.mxu0 0
          %616 = vmatpush1.bf16.msra.mxu0 0
          %617 = vmatprep.mubr.bf16.mxu0 0
          %618 = vmatmul.mubr.bf16.gmra.mrb[0].mxu0 %v570
          %v619 = vpop.f32.mrb[0].mxu0
          %v620 = vadd.f32 0.0, %v619
          %v621 = vpop.f32.mrb[0].mxu0
          %v622 = vpop.f32.mrb[0].mxu0
          %v623 = vadd.f32 0.0, %v622
          %v624 = vpop.f32.mrb[0].mxu0
          %625 = vmatprep.mubr.bf16.mxu0 0
          %626 = vmatmul.mubr.bf16.gmra.mrb[0].mxu0 %v573
          %v627 = vpop.f32.mrb[0].mxu0
          %v628 = vadd.f32 0.0, %v627
          %v629 = vpop.f32.mrb[0].mxu0
          %v630 = vpop.f32.mrb[0].mxu0
          %v631 = vadd.f32 0.0, %v630
          %v632 = vpop.f32.mrb[0].mxu0
          %633 = vmatprep.mubr.bf16.mxu0 0
          %634 = vmatmul.mubr.bf16.gmra.mrb[0].mxu0 %v576
          %v635 = vpop.f32.mrb[0].mxu0
          %v636 = vadd.f32 0.0, %v635
          %v637 = vpop.f32.mrb[0].mxu0
          %v638 = vpop.f32.mrb[0].mxu0
          %v639 = vadd.f32 0.0, %v638
          %v640 = vpop.f32.mrb[0].mxu0
          %641 = vmatprep.mubr.bf16.mxu0 0
          %642 = vmatmul.mubr.bf16.gmra.mrb[0].mxu0 %v579
          %v643 = vpop.f32.mrb[0].mxu0
          %v644 = vadd.f32 0.0, %v643
          %v645 = vpop.f32.mrb[0].mxu0
          %v646 = vpop.f32.mrb[0].mxu0
          %v647 = vadd.f32 0.0, %v646
          %v648 = vpop.f32.mrb[0].mxu0
          %649 = vdwg.mxu0
          %v651 = vsel %vm509, %v543, 0
          %v654 = vsel %vm509, %v544, 0
          %v657 = vsel %vm509, %v545, 0
          %v660 = vsel %vm509, %v546, 0
          %v663 = vsel %vm581, %v547, 0
          %665 = vmatprep.subr.bf16.mxu0 0
          %666 = vmatpush1.bf16.msra.mxu0 %v663
          %667 = vmatprep.subr.bf16.mxu0 0
          %668 = vmatpush1.bf16.msra.mxu0 0
          %669 = vmatprep.subr.bf16.mxu0 0
          %670 = vmatpush1.bf16.msra.mxu0 0
          %671 = vmatprep.subr.bf16.mxu0 0
          %672 = vmatpush1.bf16.msra.mxu0 0
          %673 = vmatprep.subr.bf16.mxu0 0
          %674 = vmatpush1.bf16.msra.mxu0 0
          %675 = vmatprep.subr.bf16.mxu0 0
          %676 = vmatpush1.bf16.msra.mxu0 0
          %677 = vmatprep.subr.bf16.mxu0 0
          %678 = vmatpush1.bf16.msra.mxu0 0
          %679 = vmatprep.subr.bf16.mxu0 0
          %680 = vmatpush1.bf16.msra.mxu0 0
          %681 = vmatprep.subr.bf16.mxu0 0
          %682 = vmatpush1.bf16.msra.mxu0 0
          %683 = vmatprep.subr.bf16.mxu0 0
          %684 = vmatpush1.bf16.msra.mxu0 0
          %685 = vmatprep.subr.bf16.mxu0 0
          %686 = vmatpush1.bf16.msra.mxu0 0
          %687 = vmatprep.subr.bf16.mxu0 0
          %688 = vmatpush1.bf16.msra.mxu0 0
          %689 = vmatprep.subr.bf16.mxu0 0
          %690 = vmatpush1.bf16.msra.mxu0 0
          %691 = vmatprep.subr.bf16.mxu0 0
          %692 = vmatpush1.bf16.msra.mxu0 0
          %693 = vmatprep.subr.bf16.mxu0 0
          %694 = vmatpush1.bf16.msra.mxu0 0
          %695 = vmatprep.subr.bf16.mxu0 0
          %696 = vmatpush1.bf16.msra.mxu0 0
          %697 = vmatprep.mubr.bf16.mxu0 0
          %698 = vmatmul.mubr.bf16.gmra.mrb[0].mxu0 %v651
          %v699 = vpop.f32.mrb[0].mxu0
          %v700 = vadd.f32 %v620, %v699
          %v701 = vpop.f32.mrb[0].mxu0
          %v702 = vpop.f32.mrb[0].mxu0
          %v703 = vadd.f32 %v623, %v702
          %v704 = vpop.f32.mrb[0].mxu0
          %705 = vmatprep.mubr.bf16.mxu0 0
          %706 = vmatmul.mubr.bf16.gmra.mrb[0].mxu0 %v654
          %v707 = vpop.f32.mrb[0].mxu0
          %v708 = vadd.f32 %v628, %v707
          %v709 = vpop.f32.mrb[0].mxu0
          %v710 = vpop.f32.mrb[0].mxu0
          %v711 = vadd.f32 %v631, %v710
          %v712 = vpop.f32.mrb[0].mxu0
          %713 = vmatprep.mubr.bf16.mxu0 0
          %714 = vmatmul.mubr.bf16.gmra.mrb[0].mxu0 %v657
          %v715 = vpop.f32.mrb[0].mxu0
          %v716 = vadd.f32 %v636, %v715
          %v717 = vpop.f32.mrb[0].mxu0
          %v718 = vpop.f32.mrb[0].mxu0
          %v719 = vadd.f32 %v639, %v718
          %v720 = vpop.f32.mrb[0].mxu0
          %721 = vmatprep.mubr.bf16.mxu0 0
          %722 = vmatmul.mubr.bf16.gmra.mrb[0].mxu0 %v660
          %v723 = vpop.f32.mrb[0].mxu0
          %v724 = vadd.f32 %v644, %v723
          %v725 = vpop.f32.mrb[0].mxu0
          %v726 = vpop.f32.mrb[0].mxu0
          %v727 = vadd.f32 %v647, %v726
          %v728 = vpop.f32.mrb[0].mxu0
          %729 = vdwg.mxu0
          %v730 = vld [vmem:[%s4] sm:$0x1]
          %v732 = vlaneseq
          %v733 = vshrl.u32 %v732, 7
          %v734 = vsub.s32 0, %v733
          %v735 = vrot.slane %v730, %v734
          %v737 = vadd.f32 %v700, %v735
          %v738 = vadd.f32 %v703, %v735
          %v739 = vadd.f32 %v708, %v735
          %v740 = vadd.f32 %v711, %v735
          %v741 = vadd.f32 %v716, %v735
          %v742 = vadd.f32 %v719, %v735
          %v743 = vadd.f32 %v724, %v735
          %v744 = vadd.f32 %v727, %v735
          %v745 = vmax.f32 %v737, 0.0
          %v746 = vmax.f32 %v738, 0.0
          %v747 = vmax.f32 %v739, 0.0
          %v748 = vmax.f32 %v740, 0.0
          %v749 = vmax.f32 %v741, 0.0
          %v750 = vmax.f32 %v742, 0.0
          %v751 = vmax.f32 %v743, 0.0
          %v752 = vmax.f32 %v744, 0.0
          %v753 = vpack.c.bf16 %v746, %v745
          %v754 = vpack.c.bf16 %v748, %v747
          %v755 = vpack.c.bf16 %v750, %v749
          %v756 = vpack.c.bf16 %v752, %v751
          %v761 = vunpack.c.l.b16 %v753
          %v762 = vunpack.c.h.b16 %v753
          %v763 = vunpack.c.l.b16 %v754
          %v764 = vunpack.c.h.b16 %v754
          %v765 = vunpack.c.l.b16 %v755
          %v766 = vunpack.c.h.b16 %v755
          %v767 = vunpack.c.l.b16 %v756
          %v768 = vunpack.c.h.b16 %v756
          %v769 = vpack.c.b16 %v761, %v761
          %v770 = vpack.c.b16 %v762, %v762
          %v771 = vpack.c.b16 %v763, %v763
          %v772 = vpack.c.b16 %v764, %v764
          %v773 = vpack.c.b16 %v765, %v765
          %v774 = vpack.c.b16 %v766, %v766
          %v775 = vpack.c.b16 %v767, %v767
          %v776 = vpack.c.b16 %v768, %v768
          %vm785 = vcmask 257024
          %786 = vst.msk [vmem:[%s311] sm:$0xf] %vm785, %v769
          %787 = vst.msk [vmem:[%s311 + $0x4] sm:$0xf] %vm785, %v770
          %788 = vst.msk [vmem:[%s311 + $0x8] sm:$0xf] %vm785, %v771
          %789 = vst.msk [vmem:[%s311 + $0xc] sm:$0xf] %vm785, %v772
          %790 = vst.msk [vmem:[%s311 + $0x10] sm:$0xf] %vm785, %v773
          %791 = vst.msk [vmem:[%s311 + $0x14] sm:$0xf] %vm785, %v774
          %792 = vst.msk [vmem:[%s311 + $0x18] sm:$0xf] %vm785, %v775
          %793 = vst.msk [vmem:[%s311 + $0x1c] sm:$0xf] %vm785, %v776
        $region89: #{net_forward.2} parent=76 // pred_fallthru
          _
        %s794 = smul.u32 8, %s20
        %p795 = scmp.lt.s32.totalorder %s794, 31
        %s796 = scalar_select %p795, %s794, 31
        %s797 = smul.addr %s796, 4
        %s798 = scalar_lea.vmem %s5, %s797
        // Predicated region
        $region90: #{net_forward.2} parent=76 // pred_check
          %p799 = pneg %p158
        $region91: #{net_forward.2} parent=76 // pred_check_branch
          %801 = sbr.rel (%p799) target = $region93
        $region92: #{net_forward.2} parent=76 // pred_region
          %s802 = smul.u32 8, %s20
        $region93: #{net_forward.2} parent=76 // pred_fallthru
          _
      $region77: #{net_forward.2} parent=5 // pred_fallthru
        _
      %p803 = scmp.le.s32.totalorder 2, %s11
      // Predicated region
      $region94: #{net_forward.2} parent=5 // pred_check
        %p804 = pneg %p803
      $region95: #{net_forward.2} parent=5 // pred_check_branch
        %806 = sbr.rel (%p804) target = $region97
      $region96: #{net_forward.2} parent=5 // pred_region
        %s807 = ssub.s32 %s11, 2
        // Predicated region
        $region98: #{net_forward.2} parent=96 // pred_check
          %p808 = pneg %p164
        $region99: #{net_forward.2} parent=96 // pred_check_branch
          %810 = sbr.rel (%p808) target = $region101
        $region100: #{net_forward.2} parent=96 // pred_region
          %s811 = smul.u32 8, %s22
          %p812 = scmp.lt.s32.totalorder %s811, 31
          %s813 = scalar_select %p812, %s811, 31
          %s814 = smul.addr %s813, 4
          %s815 = scalar_lea.vmem %s5, %s814
        $region101: #{net_forward.2} parent=96 // pred_fallthru
          _
      $region97: #{net_forward.2} parent=5 // pred_fallthru
        _
    $region6: #{net_forward.2} parent=1 // loop_footer
      %s15 = sadd.s32 1, %s11
    $region7: #{net_forward.2} parent=1 // loop_footer_branch
      %10 = sbr.rel target = $region3
    $region8: #{net_forward.2} parent=1 // loop_exit
      _

// kernel: net_forward.3
$region0: #{net_forward.3}
  #allocation0 [shape = 'u32[]', space=smem, size = 0x4, offset = 0x4, fixed_abs, tag = 'smem constant byte address 0x4 - core index']
  #allocation1 [shape = 'u32[144,128]{1,0:T(1,128)}', space=vmem, size = 0x12000, scoped, tag = 'internal scratch']
  #allocation2 [shape = 'f32[64,32]{1,0:T(8,128)}', space=vmem, size = 0x8000, scoped, tag = 'scratch operand']
  %s0 = inlined_call_operand.vmem [shape: bf16[256,256], index: 0, kind: input, shape index: {}]
  %s1 = inlined_call_operand.vmem [shape: bf16[256,32], index: 1, kind: input, shape index: {}]
  %s2 = inlined_call_operand.vmem [shape: bf16[32,32], index: 2, kind: input, shape index: {}]
  %s3 = inlined_call_operand.vmem [shape: bf16[32,32], index: 3, kind: input, shape index: {}]
  %s4 = inlined_call_operand.vmem [shape: f32[1,32], index: 4, kind: input, shape index: {}]
  %s5 = inlined_call_operand.vmem [shape: bf16[32,4], index: 5, kind: input, shape index: {}]
  %s6 = inlined_call_operand.vmem [shape: bf16[32,4], index: 6, kind: input, shape index: {}]
  %s7 = inlined_call_operand.vmem [shape: f32[1,4], index: 7, kind: input, shape index: {}]
  %s8 = inlined_call_operand.vmem [shape: f32[256,4], index: 8, kind: output, shape index: {}]
  %s9 = sld [smem:[#allocation0]]
  $region114: #{net_forward.3} parent=0
    _
  %s11 = ssub.s32 1, %s9
  %s12 = scalar_select 0, %s11, %s9
  $region1: #{net_forward.3} parent=0
    #allocation3 [shape = 'u8[32768]{0}', space=vmem, size = 0x8000, scoped, tag = 'input window, operand 0']
    loop: start=0, step=1, limit=10
    $region2: #{net_forward.3} parent=1 // loop_pre_header
      _
    $region3: #{net_forward.3} parent=1 // loop_header
      %s14 = sphi 0, %s18
      %p15 = scmp.ge.s32.totalorder %s14, 10
      %s21 = sphi 0, %s33
      %s22 = sphi 0, %s29
      %s23 = sphi 0, %s21
      %s24 = sphi 0, %s22
      %s25 = sphi 0, %s23
      %s26 = sphi 0, %s24
      %s38 = sphi 0, %s40
      %s41 = sphi 0, %s38
      %s42 = sphi 0, %s41
      %s58 = sphi 0, %s42
      %s62 = sphi 0, %s62
      %s64 = sphi 0, %s62
      %s65 = sphi 0, %s64
      %s79 = sphi 0, %s65
      %s83 = sphi 0, %s83
      %s85 = sphi 0, %s83
      %s86 = sphi 0, %s85
      %s100 = sphi 0, %s86
      %s104 = sphi 0, %s104
      %s106 = sphi 0, %s104
      %s107 = sphi 0, %s106
      %s121 = sphi 0, %s107
      %s125 = sphi 0, %s125
      %s127 = sphi 0, %s125
      %s128 = sphi 0, %s127
      %s142 = sphi 0, %s128
      %s146 = sphi 0, %s146
      %s148 = sphi 0, %s146
      %s149 = sphi 0, %s148
      %s163 = sphi 0, %s149
      %s167 = sphi 0, %s167
      %s169 = sphi 0, %s167
      %s170 = sphi 0, %s169
      %s184 = sphi 0, %s170
      %s188 = sphi 0, %s188
      %s190 = sphi 0, %s188
      %s191 = sphi 0, %s190
      %s205 = sphi 0, %s191
      %s211 = sphi 0, %s213
      %s214 = sphi 0, %s211
      %s215 = sphi 0, %s214
      %s231 = sphi 0, %s215
    $region4: #{net_forward.3} parent=1 // loop_header_branch
      %17 = sbr.rel (%p15) target = $region8
    $region5: #{net_forward.3} parent=1 // loop_body
      %s19 = ssub.s32 %s14, 1
      %s20 = ssub.s32 %s14, 2
      %s27 = sadd.s32 1, %s22
      %p28 = scmp.ge.s32.totalorder %s27, 2
      %s29 = scalar_select %p28, 0, %s27
      %s30 = sadd.s32 1, %s21
      %s31 = scalar_select %p28, %s30, %s21
      %p32 = scmp.ge.s32.totalorder %s31, 4
      %s33 = scalar_select %p32, 0, %s31
      %s34 = ssub.s32 %s21, %s33
      %s35 = ssub.s32 %s22, %s29
      %s36 = sor.u32 %s34, %s35
      %p37 = scmp.eq.s32.totalorder %s36, 0
      %s39 = sadd.s32 %s38, 1
      %s40 = scalar_select %p37, %s38, %s39
      %p43 = pneg %p37
      %p44 = scmp.eq.s32.totalorder %s14, 7
      %p45 = por %p43, %p44
      %p46 = scmp.ne.s32.totalorder %s38, %s41
      %p47 = scmp.eq.s32.totalorder %s14, 0
      %p48 = por %p46, %p47
      %p49 = scmp.ne.s32.totalorder %s38, %s41
      %p50 = scmp.eq.s32.totalorder %s19, 7
      %p51 = por %p49, %p50
      %p52 = scmp.ne.s32.totalorder %s41, %s42
      %p53 = scmp.eq.s32.totalorder %s19, 0
      %p54 = por %p52, %p53
      %p55 = scmp.ne.s32.totalorder %s41, %s42
      %p56 = scmp.eq.s32.totalorder %s20, 7
      %p57 = por %p55, %p56
      %p59 = scmp.ne.s32.totalorder %s42, %s58
      %p60 = scmp.eq.s32.totalorder %s20, 0
      %p61 = por %p59, %p60
      %s63 = sadd.s32 %s62, 1
      %p66 = scmp.eq.s32.totalorder %s14, 7
      %p67 = scmp.ne.s32.totalorder %s62, %s64
      %p68 = scmp.eq.s32.totalorder %s14, 0
      %p69 = por %p67, %p68
      %p70 = scmp.ne.s32.totalorder %s62, %s64
      %p71 = scmp.eq.s32.totalorder %s19, 7
      %p72 = por %p70, %p71
      %p73 = scmp.ne.s32.totalorder %s64, %s65
      %p74 = scmp.eq.s32.totalorder %s19, 0
      %p75 = por %p73, %p74
      %p76 = scmp.ne.s32.totalorder %s64, %s65
      %p77 = scmp.eq.s32.totalorder %s20, 7
      %p78 = por %p76, %p77
      %p80 = scmp.ne.s32.totalorder %s65, %s79
      %p81 = scmp.eq.s32.totalorder %s20, 0
      %p82 = por %p80, %p81
      %s84 = sadd.s32 %s83, 1
      %p87 = scmp.eq.s32.totalorder %s14, 7
      %p88 = scmp.ne.s32.totalorder %s83, %s85
      %p89 = scmp.eq.s32.totalorder %s14, 0
      %p90 = por %p88, %p89
      %p91 = scmp.ne.s32.totalorder %s83, %s85
      %p92 = scmp.eq.s32.totalorder %s19, 7
      %p93 = por %p91, %p92
      %p94 = scmp.ne.s32.totalorder %s85, %s86
      %p95 = scmp.eq.s32.totalorder %s19, 0
      %p96 = por %p94, %p95
      %p97 = scmp.ne.s32.totalorder %s85, %s86
      %p98 = scmp.eq.s32.totalorder %s20, 7
      %p99 = por %p97, %p98
      %p101 = scmp.ne.s32.totalorder %s86, %s100
      %p102 = scmp.eq.s32.totalorder %s20, 0
      %p103 = por %p101, %p102
      %s105 = sadd.s32 %s104, 1
      %p108 = scmp.eq.s32.totalorder %s14, 7
      %p109 = scmp.ne.s32.totalorder %s104, %s106
      %p110 = scmp.eq.s32.totalorder %s14, 0
      %p111 = por %p109, %p110
      %p112 = scmp.ne.s32.totalorder %s104, %s106
      %p113 = scmp.eq.s32.totalorder %s19, 7
      %p114 = por %p112, %p113
      %p115 = scmp.ne.s32.totalorder %s106, %s107
      %p116 = scmp.eq.s32.totalorder %s19, 0
      %p117 = por %p115, %p116
      %p118 = scmp.ne.s32.totalorder %s106, %s107
      %p119 = scmp.eq.s32.totalorder %s20, 7
      %p120 = por %p118, %p119
      %p122 = scmp.ne.s32.totalorder %s107, %s121
      %p123 = scmp.eq.s32.totalorder %s20, 0
      %p124 = por %p122, %p123
      %s126 = sadd.s32 %s125, 1
      %p129 = scmp.eq.s32.totalorder %s14, 7
      %p130 = scmp.ne.s32.totalorder %s125, %s127
      %p131 = scmp.eq.s32.totalorder %s14, 0
      %p132 = por %p130, %p131
      %p133 = scmp.ne.s32.totalorder %s125, %s127
      %p134 = scmp.eq.s32.totalorder %s19, 7
      %p135 = por %p133, %p134
      %p136 = scmp.ne.s32.totalorder %s127, %s128
      %p137 = scmp.eq.s32.totalorder %s19, 0
      %p138 = por %p136, %p137
      %p139 = scmp.ne.s32.totalorder %s127, %s128
      %p140 = scmp.eq.s32.totalorder %s20, 7
      %p141 = por %p139, %p140
      %p143 = scmp.ne.s32.totalorder %s128, %s142
      %p144 = scmp.eq.s32.totalorder %s20, 0
      %p145 = por %p143, %p144
      %s147 = sadd.s32 %s146, 1
      %p150 = scmp.eq.s32.totalorder %s14, 7
      %p151 = scmp.ne.s32.totalorder %s146, %s148
      %p152 = scmp.eq.s32.totalorder %s14, 0
      %p153 = por %p151, %p152
      %p154 = scmp.ne.s32.totalorder %s146, %s148
      %p155 = scmp.eq.s32.totalorder %s19, 7
      %p156 = por %p154, %p155
      %p157 = scmp.ne.s32.totalorder %s148, %s149
      %p158 = scmp.eq.s32.totalorder %s19, 0
      %p159 = por %p157, %p158
      %p160 = scmp.ne.s32.totalorder %s148, %s149
      %p161 = scmp.eq.s32.totalorder %s20, 7
      %p162 = por %p160, %p161
      %p164 = scmp.ne.s32.totalorder %s149, %s163
      %p165 = scmp.eq.s32.totalorder %s20, 0
      %p166 = por %p164, %p165
      %s168 = sadd.s32 %s167, 1
      %p171 = scmp.eq.s32.totalorder %s14, 7
      %p172 = scmp.ne.s32.totalorder %s167, %s169
      %p173 = scmp.eq.s32.totalorder %s14, 0
      %p174 = por %p172, %p173
      %p175 = scmp.ne.s32.totalorder %s167, %s169
      %p176 = scmp.eq.s32.totalorder %s19, 7
      %p177 = por %p175, %p176
      %p178 = scmp.ne.s32.totalorder %s169, %s170
      %p179 = scmp.eq.s32.totalorder %s19, 0
      %p180 = por %p178, %p179
      %p181 = scmp.ne.s32.totalorder %s169, %s170
      %p182 = scmp.eq.s32.totalorder %s20, 7
      %p183 = por %p181, %p182
      %p185 = scmp.ne.s32.totalorder %s170, %s184
      %p186 = scmp.eq.s32.totalorder %s20, 0
      %p187 = por %p185, %p186
      %s189 = sadd.s32 %s188, 1
      %p192 = scmp.eq.s32.totalorder %s14, 7
      %p193 = scmp.ne.s32.totalorder %s188, %s190
      %p194 = scmp.eq.s32.totalorder %s14, 0
      %p195 = por %p193, %p194
      %p196 = scmp.ne.s32.totalorder %s188, %s190
      %p197 = scmp.eq.s32.totalorder %s19, 7
      %p198 = por %p196, %p197
      %p199 = scmp.ne.s32.totalorder %s190, %s191
      %p200 = scmp.eq.s32.totalorder %s19, 0
      %p201 = por %p199, %p200
      %p202 = scmp.ne.s32.totalorder %s190, %s191
      %p203 = scmp.eq.s32.totalorder %s20, 7
      %p204 = por %p202, %p203
      %p206 = scmp.ne.s32.totalorder %s191, %s205
      %p207 = scmp.eq.s32.totalorder %s20, 0
      %p208 = por %p206, %p207
      %s209 = ssub.s32 %s21, %s33
      %p210 = scmp.eq.s32.totalorder %s209, 0
      %s212 = sadd.s32 %s211, 1
      %s213 = scalar_select %p210, %s211, %s212
      %p216 = pneg %p210
      %p217 = scmp.eq.s32.totalorder %s14, 7
      %p218 = por %p216, %p217
      %p219 = scmp.ne.s32.totalorder %s211, %s214
      %p220 = scmp.eq.s32.totalorder %s14, 0
      %p221 = por %p219, %p220
      %p222 = scmp.ne.s32.totalorder %s211, %s214
      %p223 = scmp.eq.s32.totalorder %s19, 7
      %p224 = por %p222, %p223
      %p225 = scmp.ne.s32.totalorder %s214, %s215
      %p226 = scmp.eq.s32.totalorder %s19, 0
      %p227 = por %p225, %p226
      %p228 = scmp.ne.s32.totalorder %s214, %s215
      %p229 = scmp.eq.s32.totalorder %s20, 7
      %p230 = por %p228, %p229
      %p232 = scmp.ne.s32.totalorder %s215, %s231
      %p233 = scmp.eq.s32.totalorder %s20, 0
      %p234 = por %p232, %p233
      %p235 = scmp.le.s32.totalorder 1, %s14
      %p236 = scmp.lt.s32.totalorder %s14, 9
      %p237 = pnand %p235, %p236
      %p238 = pneg %p237
      // Predicated region
      $region9: #{net_forward.3} parent=5 // pred_check
        _
      $region10: #{net_forward.3} parent=5 // pred_check_branch
        %240 = sbr.rel (%p237) target = $region12
      $region11: #{net_forward.3} parent=5 // pred_region
        %s241 = ssub.s32 %s14, 1
        // Predicated region
        $region13: #{net_forward.3} parent=11 // pred_check
          %p242 = pneg %p75
        $region14: #{net_forward.3} parent=11 // pred_check_branch
          %244 = sbr.rel (%p242) target = $region16
        $region15: #{net_forward.3} parent=11 // pred_region
          _
        $region16: #{net_forward.3} parent=11 // pred_fallthru
          _
        // Predicated region
        $region17: #{net_forward.3} parent=11 // pred_check
          %p245 = pneg %p96
        $region18: #{net_forward.3} parent=11 // pred_check_branch
          %247 = sbr.rel (%p245) target = $region20
        $region19: #{net_forward.3} parent=11 // pred_region
          _
        $region20: #{net_forward.3} parent=11 // pred_fallthru
          _
        // Predicated region
        $region21: #{net_forward.3} parent=11 // pred_check
          %p248 = pneg %p117
        $region22: #{net_forward.3} parent=11 // pred_check_branch
          %250 = sbr.rel (%p248) target = $region24
        $region23: #{net_forward.3} parent=11 // pred_region
          _
        $region24: #{net_forward.3} parent=11 // pred_fallthru
          _
        // Predicated region
        $region25: #{net_forward.3} parent=11 // pred_check
          %p251 = pneg %p138
        $region26: #{net_forward.3} parent=11 // pred_check_branch
          %253 = sbr.rel (%p251) target = $region28
        $region27: #{net_forward.3} parent=11 // pred_region
          _
        $region28: #{net_forward.3} parent=11 // pred_fallthru
          _
        // Predicated region
        $region29: #{net_forward.3} parent=11 // pred_check
          %p254 = pneg %p159
        $region30: #{net_forward.3} parent=11 // pred_check_branch
          %256 = sbr.rel (%p254) target = $region32
        $region31: #{net_forward.3} parent=11 // pred_region
          _
        $region32: #{net_forward.3} parent=11 // pred_fallthru
          _
        // Predicated region
        $region33: #{net_forward.3} parent=11 // pred_check
          %p257 = pneg %p180
        $region34: #{net_forward.3} parent=11 // pred_check_branch
          %259 = sbr.rel (%p257) target = $region36
        $region35: #{net_forward.3} parent=11 // pred_region
          _
        $region36: #{net_forward.3} parent=11 // pred_fallthru
          _
        // Predicated region
        $region37: #{net_forward.3} parent=11 // pred_check
          %p260 = pneg %p201
        $region38: #{net_forward.3} parent=11 // pred_check_branch
          %262 = sbr.rel (%p260) target = $region40
        $region39: #{net_forward.3} parent=11 // pred_region
          _
        $region40: #{net_forward.3} parent=11 // pred_fallthru
          _
      $region12: #{net_forward.3} parent=5 // pred_fallthru
        _
      %p263 = scmp.lt.s32.totalorder %s14, 8
      // Predicated region
      $region41: #{net_forward.3} parent=5 // pred_check
        %p264 = pneg %p263
      $region42: #{net_forward.3} parent=5 // pred_check_branch
        %266 = sbr.rel (%p264) target = $region44
      $region43: #{net_forward.3} parent=5 // pred_region
        // Predicated region
        $region45: #{net_forward.3} parent=43 // pred_check
          %p267 = pneg %p48
        $region46: #{net_forward.3} parent=43 // pred_check_branch
          %269 = sbr.rel (%p267) target = $region48
        $region47: #{net_forward.3} parent=43 // pred_region
          %s270 = sand.u32 %s38, 1
          %s271 = sand.u32 %s38, 1
          %s272 = smul.addr %s271, 32
          %s273 = scalar_lea.vmem [#allocation3], %s272
          %s274 = smul.u32 8, %s21
          %s275 = smul.addr %s274, 2
          %s276 = sadd.s32 %s22, %s275
          %s277 = smul.addr %s276, 4
          %s278 = scalar_lea.vmem %s0, %s277
          // Predicated region
          $region49: #{net_forward.3} parent=47 // pred_check
            _
          $region50: #{net_forward.3} parent=47 // pred_check_branch
            %280 = sbr.rel (0) target = $region52
          $region51: #{net_forward.3} parent=47 // pred_region
            // Predicated region
            $region53: #{net_forward.3} parent=51 // pred_check
              _
            $region54: #{net_forward.3} parent=51 // pred_check_branch
              %282 = sbr.rel target = $region56
            $region55: #{net_forward.3} parent=51 // pred_region
              // Predicated region
              $region68: #{net_forward.3} parent=55 // pred_check
                _
              $region69: #{net_forward.3} parent=55 // pred_check_branch
                %311 = sbr.rel (0) target = $region71
              $region70: #{net_forward.3} parent=55 // pred_region
                loop: start=0, step=1, limit=1
                $region72: #{net_forward.3} parent=70 // loop_pre_header
                  _
                $region73: #{net_forward.3} parent=70 // loop_header
                  %s313 = sphi 0, %s317
                  %p314 = scmp.ge.s32.totalorder %s313, 1
                  %s318 = sphi %s278, %s278
                  %s319 = sphi %s273, %s273
                $region74: #{net_forward.3} parent=70 // loop_header_branch
                  %316 = sbr.rel (%p314) target = $region78
                $region75: #{net_forward.3} parent=70 // loop_body
                  _
                $region76: #{net_forward.3} parent=70 // loop_footer
                  %s317 = sadd.s32 1, %s313
                $region77: #{net_forward.3} parent=70 // loop_footer_branch
                  %312 = sbr.rel target = $region73
                $region78: #{net_forward.3} parent=70 // loop_exit
                  _
                loop: start=0, step=1, limit=1
                $region79: #{net_forward.3} parent=70 // loop_pre_header
                  _
                $region80: #{net_forward.3} parent=70 // loop_header
                  %s322 = sphi 0, %s326
                  %p323 = scmp.ge.s32.totalorder %s322, 1
                  %s327 = sphi %s278, %s278
                  %s328 = sphi %s273, %s273
                $region81: #{net_forward.3} parent=70 // loop_header_branch
                  %325 = sbr.rel (%p323) target = $region85
                $region82: #{net_forward.3} parent=70 // loop_body
                  %v329 = vld [vmem:[%s327] sm:$0xf]
                  %330 = vst [vmem:[%s328] sm:$0xf] %v329
                  %v331 = vld [vmem:[%s327 + $0x8] sm:$0xf]
                  %332 = vst [vmem:[%s328 + $0x4] sm:$0xf] %v331
                  %v333 = vld [vmem:[%s327 + $0x10] sm:$0xf]
                  %334 = vst [vmem:[%s328 + $0x8] sm:$0xf] %v333
                  %v335 = vld [vmem:[%s327 + $0x18] sm:$0xf]
                  %336 = vst [vmem:[%s328 + $0xc] sm:$0xf] %v335
                  %v337 = vld [vmem:[%s327 + $0x20] sm:$0xf]
                  %338 = vst [vmem:[%s328 + $0x10] sm:$0xf] %v337
                  %v339 = vld [vmem:[%s327 + $0x28] sm:$0xf]
                  %340 = vst [vmem:[%s328 + $0x14] sm:$0xf] %v339
                  %v341 = vld [vmem:[%s327 + $0x30] sm:$0xf]
                  %342 = vst [vmem:[%s328 + $0x18] sm:$0xf] %v341
                  %v343 = vld [vmem:[%s327 + $0x38] sm:$0xf]
                  %344 = vst [vmem:[%s328 + $0x1c] sm:$0xf] %v343
                $region83: #{net_forward.3} parent=70 // loop_footer
                  %s326 = sadd.s32 1, %s322
                $region84: #{net_forward.3} parent=70 // loop_footer_branch
                  %321 = sbr.rel target = $region80
                $region85: #{net_forward.3} parent=70 // loop_exit
                  _
              $region71: #{net_forward.3} parent=55 // pred_fallthru
                _
            $region56: #{net_forward.3} parent=51 // pred_fallthru
              _
            // Predicated region
            $region57: #{net_forward.3} parent=51 // pred_check
              _
            $region58: #{net_forward.3} parent=51 // pred_check_branch
              %284 = sbr.rel (0) target = $region60
            $region59: #{net_forward.3} parent=51 // pred_region
              loop: start=0, step=1, limit=1
              $region61: #{net_forward.3} parent=59 // loop_pre_header
                _
              $region62: #{net_forward.3} parent=59 // loop_header
                %s287 = sphi 0, %s291
                %p288 = scmp.ge.s32.totalorder %s287, 1
                %s292 = sphi %s278, %s278
                %s293 = sphi %s273, %s273
              $region63: #{net_forward.3} parent=59 // loop_header_branch
                %290 = sbr.rel (%p288) target = $region67
              $region64: #{net_forward.3} parent=59 // loop_body
                %v294 = vld [vmem:[%s292] sm:$0xf]
                %295 = vst [vmem:[%s293] sm:$0xf] %v294
                %v296 = vld [vmem:[%s292 + $0x8] sm:$0xf]
                %297 = vst [vmem:[%s293 + $0x4] sm:$0xf] %v296
                %v298 = vld [vmem:[%s292 + $0x10] sm:$0xf]
                %299 = vst [vmem:[%s293 + $0x8] sm:$0xf] %v298
                %v300 = vld [vmem:[%s292 + $0x18] sm:$0xf]
                %301 = vst [vmem:[%s293 + $0xc] sm:$0xf] %v300
                %v302 = vld [vmem:[%s292 + $0x20] sm:$0xf]
                %303 = vst [vmem:[%s293 + $0x10] sm:$0xf] %v302
                %v304 = vld [vmem:[%s292 + $0x28] sm:$0xf]
                %305 = vst [vmem:[%s293 + $0x14] sm:$0xf] %v304
                %v306 = vld [vmem:[%s292 + $0x30] sm:$0xf]
                %307 = vst [vmem:[%s293 + $0x18] sm:$0xf] %v306
                %v308 = vld [vmem:[%s292 + $0x38] sm:$0xf]
                %309 = vst [vmem:[%s293 + $0x1c] sm:$0xf] %v308
              $region65: #{net_forward.3} parent=59 // loop_footer
                %s291 = sadd.s32 1, %s287
              $region66: #{net_forward.3} parent=59 // loop_footer_branch
                %286 = sbr.rel target = $region62
              $region67: #{net_forward.3} parent=59 // loop_exit
                _
            $region60: #{net_forward.3} parent=51 // pred_fallthru
              _
          $region52: #{net_forward.3} parent=47 // pred_fallthru
            _
          %345 = vnop
        $region48: #{net_forward.3} parent=43 // pred_fallthru
          _
      $region44: #{net_forward.3} parent=5 // pred_fallthru
        _
      %p346 = scmp.le.s32.totalorder 1, %s14
      %p347 = scmp.lt.s32.totalorder %s14, 9
      %p348 = pnand %p346, %p347
      %p349 = pneg %p348
      // Predicated region
      $region86: #{net_forward.3} parent=5 // pred_check
        _
      $region87: #{net_forward.3} parent=5 // pred_check_branch
        %351 = sbr.rel (%p348) target = $region89
      $region88: #{net_forward.3} parent=5 // pred_region
        %s352 = ssub.s32 %s14, 1
        %s353 = sand.u32 %s41, 1
        %s354 = sand.u32 %s41, 1
        %s355 = smul.addr %s354, 32
        %s356 = scalar_lea.vmem [#allocation3], %s355
        // Predicated region
        $region90: #{net_forward.3} parent=88 // pred_check
          %p357 = pneg %p54
        $region91: #{net_forward.3} parent=88 // pred_check_branch
          %359 = sbr.rel (%p357) target = $region93
        $region92: #{net_forward.3} parent=88 // pred_region
          _
        $region93: #{net_forward.3} parent=88 // pred_fallthru
          _
        %s360 = sand.u32 %s41, 1
        %s361 = sand.u32 %s41, 1
        %s362 = smul.addr %s361, 32
        %s363 = scalar_lea.vmem [#allocation3], %s362
        %p364 = pneg %p54
        %p365 = pneg %p51
        %p366 = pneg %p75
        %p367 = pneg %p72
        %p368 = pneg %p96
        %p369 = pneg %p93
        %p370 = pneg %p117
        %p371 = pneg %p114
        %p372 = pneg %p138
        %p373 = pneg %p135
        %p374 = pneg %p159
        %p375 = pneg %p156
        %p376 = pneg %p180
        %p377 = pneg %p177
        %p378 = pneg %p201
        %p379 = pneg %p198
        %p380 = pneg %p227
        %p381 = pneg %p224
        %s382 = smul.u32 8, %s23
        %p383 = scmp.lt.s32.totalorder %s382, 31
        %s384 = scalar_select %p383, %s382, 31
        %s385 = smul.addr %s384, 8
        %s386 = scalar_lea.vmem %s8, %s385
        %s387 = smul.u32 8, %s23
        %s388 = smul.u32 8, %s23
        %p389 = scmp.lt.s32.totalorder %s388, 31
        %s390 = scalar_select %p389, %s388, 31
        %s391 = smul.addr %s390, 8
        %s392 = scalar_lea.vmem %s8, %s391
        %s393 = smul.u32 8, %s23
        %p395 = scmp.eq.s32.totalorder %s24, 0
        // Predicated region
        $region94: #{net_forward.3} parent=88 // pred_check
          %p396 = pneg %p395
        $region95: #{net_forward.3} parent=88 // pred_check_branch
          %398 = sbr.rel (%p396) target = $region97
        $region96: #{net_forward.3} parent=88 // pred_region
          %vm399 = vcmask 261120
          %400 = vst.msk [vmem:[#allocation2] sm:$0xff] %vm399, 0.0
          %401 = vst.msk [vmem:[#allocation2 + $0x8] sm:$0xff] %vm399, 0.0
          %402 = vst.msk [vmem:[#allocation2 + $0x10] sm:$0xff] %vm399, 0.0
          %403 = vst.msk [vmem:[#allocation2 + $0x18] sm:$0xff] %vm399, 0.0
          %404 = vst.msk [vmem:[#allocation2 + $0x20] sm:$0xff] %vm399, 0.0
          %405 = vst.msk [vmem:[#allocation2 + $0x28] sm:$0xff] %vm399, 0.0
          %406 = vst.msk [vmem:[#allocation2 + $0x30] sm:$0xff] %vm399, 0.0
          %407 = vst.msk [vmem:[#allocation2 + $0x38] sm:$0xff] %vm399, 0.0
        $region97: #{net_forward.3} parent=88 // pred_fallthru
          _
        %s408 = smul.u32 %s24, 128
        %s409 = sshra.s32 %s408, 3
        %s410 = sand.u32 %s408, 7
        %s411 = smul.addr %s409, 4
        %s412 = scalar_lea.vmem %s1, %s411
        %v413 = vld [vmem:[%s412] sm:$0xf]
        %v414 = vld [vmem:[%s412 + $0x4] sm:$0xf]
        %v415 = vld [vmem:[%s412 + $0x8] sm:$0xf]
        %v416 = vld [vmem:[%s412 + $0xc] sm:$0xf]
        %v417 = vld [vmem:[%s412 + $0x10] sm:$0xf]
        %v418 = vld [vmem:[%s412 + $0x14] sm:$0xf]
        %v419 = vld [vmem:[%s412 + $0x18] sm:$0xf]
        %v420 = vld [vmem:[%s412 + $0x1c] sm:$0xf]
        %v421 = vld [vmem:[%s412 + $0x20] sm:$0xf]
        %v422 = vld [vmem:[%s412 + $0x24] sm:$0xf]
        %v423 = vld [vmem:[%s412 + $0x28] sm:$0xf]
        %v424 = vld [vmem:[%s412 + $0x2c] sm:$0xf]
        %v425 = vld [vmem:[%s412 + $0x30] sm:$0xf]
        %v426 = vld [vmem:[%s412 + $0x34] sm:$0xf]
        %v427 = vld [vmem:[%s412 + $0x38] sm:$0xf]
        %v428 = vld [vmem:[%s412 + $0x3c] sm:$0xf]
        %v429 = vld [vmem:[#allocation2] sm:$0xff]
        %v430 = vld [vmem:[#allocation2 + $0x8] sm:$0xff]
        %v431 = vld [vmem:[#allocation2 + $0x10] sm:$0xff]
        %v432 = vld [vmem:[#allocation2 + $0x18] sm:$0xff]
        %v433 = vld [vmem:[#allocation2 + $0x20] sm:$0xff]
        %v434 = vld [vmem:[#allocation2 + $0x28] sm:$0xff]
        %v435 = vld [vmem:[#allocation2 + $0x30] sm:$0xff]
        %v436 = vld [vmem:[#allocation2 + $0x38] sm:$0xff]
        %v437 = vld [vmem:[%s356] sm:$0xf]
        %v438 = vld [vmem:[%s356 + $0x4] sm:$0xf]
        %v439 = vld [vmem:[%s356 + $0x8] sm:$0xf]
        %v440 = vld [vmem:[%s356 + $0xc] sm:$0xf]
        %v441 = vld [vmem:[%s356 + $0x10] sm:$0xf]
        %v442 = vld [vmem:[%s356 + $0x14] sm:$0xf]
        %v443 = vld [vmem:[%s356 + $0x18] sm:$0xf]
        %v444 = vld [vmem:[%s356 + $0x1c] sm:$0xf]
        %v453 = vunpack.c.l.b16 %v437
        %v454 = vunpack.c.l.b16 %v438
        %v455 = vunpack.c.l.b16 %v439
        %v456 = vunpack.c.l.b16 %v440
        %v457 = vunpack.c.l.b16 %v441
        %v458 = vunpack.c.l.b16 %v442
        %v459 = vunpack.c.l.b16 %v443
        %v460 = vunpack.c.l.b16 %v444
        %v461 = vpack.c.b16 %v454, %v453
        %v462 = vpack.c.b16 %v456, %v455
        %v463 = vpack.c.b16 %v458, %v457
        %v464 = vpack.c.b16 %v460, %v459
        %v485 = vunpack.c.l.b16 %v413
        %v486 = vunpack.c.l.b16 %v414
        %v487 = vunpack.c.l.b16 %v415
        %v488 = vunpack.c.l.b16 %v416
        %v489 = vunpack.c.l.b16 %v417
        %v490 = vunpack.c.l.b16 %v418
        %v491 = vunpack.c.l.b16 %v419
        %v492 = vunpack.c.l.b16 %v420
        %v493 = vunpack.c.l.b16 %v421
        %v494 = vunpack.c.l.b16 %v422
        %v495 = vunpack.c.l.b16 %v423
        %v496 = vunpack.c.l.b16 %v424
        %v497 = vunpack.c.l.b16 %v425
        %v498 = vunpack.c.l.b16 %v426
        %v499 = vunpack.c.l.b16 %v427
        %v500 = vunpack.c.l.b16 %v428
        %v501 = vpack.c.b16 %v486, %v485
        %v502 = vpack.c.b16 %v488, %v487
        %v503 = vpack.c.b16 %v490, %v489
        %v504 = vpack.c.b16 %v492, %v491
        %v505 = vpack.c.b16 %v494, %v493
        %v506 = vpack.c.b16 %v496, %v495
        %v507 = vpack.c.b16 %v498, %v497
        %v508 = vpack.c.b16 %v500, %v499
        %517 = vmatprep.subr.bf16.mxu0 0
        %518 = vmatpush1.bf16.msra.mxu0 %v501
        %519 = vmatprep.subr.bf16.mxu0 0
        %520 = vmatpush1.bf16.msra.mxu0 %v502
        %521 = vmatprep.subr.bf16.mxu0 0
        %522 = vmatpush1.bf16.msra.mxu0 %v503
        %523 = vmatprep.subr.bf16.mxu0 0
        %524 = vmatpush1.bf16.msra.mxu0 %v504
        %525 = vmatprep.subr.bf16.mxu0 0
        %526 = vmatpush1.bf16.msra.mxu0 %v505
        %527 = vmatprep.subr.bf16.mxu0 0
        %528 = vmatpush1.bf16.msra.mxu0 %v506
        %529 = vmatprep.subr.bf16.mxu0 0
        %530 = vmatpush1.bf16.msra.mxu0 %v507
        %531 = vmatprep.subr.bf16.mxu0 0
        %532 = vmatpush1.bf16.msra.mxu0 %v508
        %533 = vmatprep.subr.bf16.mxu0 0
        %534 = vmatpush1.bf16.msra.mxu0 0
        %535 = vmatprep.subr.bf16.mxu0 0
        %536 = vmatpush1.bf16.msra.mxu0 0
        %537 = vmatprep.subr.bf16.mxu0 0
        %538 = vmatpush1.bf16.msra.mxu0 0
        %539 = vmatprep.subr.bf16.mxu0 0
        %540 = vmatpush1.bf16.msra.mxu0 0
        %541 = vmatprep.subr.bf16.mxu0 0
        %542 = vmatpush1.bf16.msra.mxu0 0
        %543 = vmatprep.subr.bf16.mxu0 0
        %544 = vmatpush1.bf16.msra.mxu0 0
        %545 = vmatprep.subr.bf16.mxu0 0
        %546 = vmatpush1.bf16.msra.mxu0 0
        %547 = vmatprep.subr.bf16.mxu0 0
        %548 = vmatpush1.bf16.msra.mxu0 0
        %549 = vmatprep.mubr.bf16.mxu0 0
        %550 = vmatmul.mubr.bf16.gmra.mrb[0].mxu0 %v461
        %v551 = vpop.f32.mrb[0].mxu0
        %v552 = vadd.f32 0.0, %v551
        %v553 = vpop.f32.mrb[0].mxu0
        %v554 = vpop.f32.mrb[0].mxu0
        %v555 = vadd.f32 0.0, %v554
        %v556 = vpop.f32.mrb[0].mxu0
        %557 = vmatprep.mubr.bf16.mxu0 0
        %558 = vmatmul.mubr.bf16.gmra.mrb[0].mxu0 %v462
        %v559 = vpop.f32.mrb[0].mxu0
        %v560 = vadd.f32 0.0, %v559
        %v561 = vpop.f32.mrb[0].mxu0
        %v562 = vpop.f32.mrb[0].mxu0
        %v563 = vadd.f32 0.0, %v562
        %v564 = vpop.f32.mrb[0].mxu0
        %565 = vmatprep.mubr.bf16.mxu0 0
        %566 = vmatmul.mubr.bf16.gmra.mrb[0].mxu0 %v463
        %v567 = vpop.f32.mrb[0].mxu0
        %v568 = vadd.f32 0.0, %v567
        %v569 = vpop.f32.mrb[0].mxu0
        %v570 = vpop.f32.mrb[0].mxu0
        %v571 = vadd.f32 0.0, %v570
        %v572 = vpop.f32.mrb[0].mxu0
        %573 = vmatprep.mubr.bf16.mxu0 0
        %574 = vmatmul.mubr.bf16.gmra.mrb[0].mxu0 %v464
        %v575 = vpop.f32.mrb[0].mxu0
        %v576 = vadd.f32 0.0, %v575
        %v577 = vpop.f32.mrb[0].mxu0
        %v578 = vpop.f32.mrb[0].mxu0
        %v579 = vadd.f32 0.0, %v578
        %v580 = vpop.f32.mrb[0].mxu0
        %581 = vdwg.mxu0
        %v582 = vadd.f32 %v429, %v552
        %v583 = vadd.f32 %v430, %v555
        %v584 = vadd.f32 %v431, %v560
        %v585 = vadd.f32 %v432, %v563
        %v586 = vadd.f32 %v433, %v568
        %v587 = vadd.f32 %v434, %v571
        %v588 = vadd.f32 %v435, %v576
        %v589 = vadd.f32 %v436, %v579
        %vm590 = vcmask 261120
        %591 = vst.msk [vmem:[#allocation2] sm:$0xff] %vm590, %v582
        %592 = vst.msk [vmem:[#allocation2 + $0x8] sm:$0xff] %vm590, %v583
        %593 = vst.msk [vmem:[#allocation2 + $0x10] sm:$0xff] %vm590, %v584
        %594 = vst.msk [vmem:[#allocation2 + $0x18] sm:$0xff] %vm590, %v585
        %595 = vst.msk [vmem:[#allocation2 + $0x20] sm:$0xff] %vm590, %v586
        %596 = vst.msk [vmem:[#allocation2 + $0x28] sm:$0xff] %vm590, %v587
        %597 = vst.msk [vmem:[#allocation2 + $0x30] sm:$0xff] %vm590, %v588
        %598 = vst.msk [vmem:[#allocation2 + $0x38] sm:$0xff] %vm590, %v589
        %p599 = scmp.eq.s32.totalorder %s24, 1
        // Predicated region
        $region98: #{net_forward.3} parent=88 // pred_check
          %p600 = pneg %p599
        $region99: #{net_forward.3} parent=88 // pred_check_branch
          %602 = sbr.rel (%p600) target = $region101
        $region100: #{net_forward.3} parent=88 // pred_region
          %s603 = smul.u32 %s23, 64
          %s604 = sshra.s32 %s603, 3
          %s605 = sand.u32 %s603, 7
          %s606 = smul.addr %s604, 4
          %s607 = scalar_lea.vmem %s1, %s606
          %v608 = vld [vmem:[%s607] sm:$0xf]
          %v609 = vld [vmem:[%s607 + $0x4] sm:$0xf]
          %v610 = vld [vmem:[%s607 + $0x8] sm:$0xf]
          %v611 = vld [vmem:[%s607 + $0xc] sm:$0xf]
          %v612 = vld [vmem:[%s607 + $0x10] sm:$0xf]
          %v613 = vld [vmem:[%s607 + $0x14] sm:$0xf]
          %v614 = vld [vmem:[%s607 + $0x18] sm:$0xf]
          %v615 = vld [vmem:[%s607 + $0x1c] sm:$0xf]
          %v616 = vld [vmem:[#allocation2] sm:$0xff]
          %v617 = vld [vmem:[#allocation2 + $0x8] sm:$0xff]
          %v618 = vld [vmem:[#allocation2 + $0x10] sm:$0xff]
          %v619 = vld [vmem:[#allocation2 + $0x18] sm:$0xff]
          %v620 = vld [vmem:[#allocation2 + $0x20] sm:$0xff]
          %v621 = vld [vmem:[#allocation2 + $0x28] sm:$0xff]
          %v622 = vld [vmem:[#allocation2 + $0x30] sm:$0xff]
          %v623 = vld [vmem:[#allocation2 + $0x38] sm:$0xff]
          %v624 = vpack.c.bf16 %v617, %v616
          %v625 = vpack.c.bf16 %v619, %v618
          %v626 = vpack.c.bf16 %v621, %v620
          %v627 = vpack.c.bf16 %v623, %v622
          %v628 = vld [vmem:[%s2] sm:$0xf]
          %v629 = vld [vmem:[%s2 + $0x4] sm:$0xf]
          %v630 = vld [vmem:[%s2 + $0x8] sm:$0xf]
          %v631 = vld [vmem:[%s2 + $0xc] sm:$0xf]
          %v632 = vld [vmem:[%s3] sm:$0xf]
          %v633 = vld [vmem:[%s3 + $0x4] sm:$0xf]
          %v634 = vld [vmem:[%s3 + $0x8] sm:$0xf]
          %v635 = vld [vmem:[%s3 + $0xc] sm:$0xf]
          %v644 = vunpack.c.l.b16 %v608
          %v645 = vunpack.c.l.b16 %v609
          %v646 = vunpack.c.l.b16 %v610
          %v647 = vunpack.c.l.b16 %v611
          %v648 = vunpack.c.l.b16 %v612
          %v649 = vunpack.c.l.b16 %v613
          %v650 = vunpack.c.l.b16 %v614
          %v651 = vunpack.c.l.b16 %v615
          %v652 = vpack.c.b16 %v645, %v644
          %v653 = vpack.c.b16 %v647, %v646
          %v654 = vpack.c.b16 %v649, %v648
          %v655 = vpack.c.b16 %v651, %v650
          %v660 = vunpack.c.l.b16 %v632
          %v661 = vunpack.c.l.b16 %v633
          %v662 = vunpack.c.l.b16 %v634
          %v663 = vunpack.c.l.b16 %v635
          %v664 = vpack.c.b16 %v661, %v660
          %v665 = vpack.c.b16 %v663, %v662
          %v669 = vsel %vm590, %v652, 0
          %v672 = vsel %vm590, %v653, 0
          %v675 = vsel %vm590, %v654, 0
          %v678 = vsel %vm590, %v655, 0
          %680 = vmatprep.subr.bf16.mxu0 0
          %681 = vmatpush1.bf16.msra.mxu0 %v664
          %682 = vmatprep.subr.bf16.mxu0 0
          %683 = vmatpush1.bf16.msra.mxu0 %v665
          %684 = vmatprep.subr.bf16.mxu0 0
          %685 = vmatpush1.bf16.msra.mxu0 0
          %686 = vmatprep.subr.bf16.mxu0 0
          %687 = vmatpush1.bf16.msra.mxu0 0
          %688 = vmatprep.subr.bf16.mxu0 0
          %689 = vmatpush1.bf16.msra.mxu0 0
          %690 = vmatprep.subr.bf16.mxu0 0
          %691 = vmatpush1.bf16.msra.mxu0 0
          %692 = vmatprep.subr.bf16.mxu0 0
          %693 = vmatpush1.bf16.msra.mxu0 0
          %694 = vmatprep.subr.bf16.mxu0 0
          %695 = vmatpush1.bf16.msra.mxu0 0
          %696 = vmatprep.subr.bf16.mxu0 0
          %697 = vmatpush1.bf16.msra.mxu0 0
          %698 = vmatprep.subr.bf16.mxu0 0
          %699 = vmatpush1.bf16.msra.mxu0 0
          %700 = vmatprep.subr.bf16.mxu0 0
          %701 = vmatpush1.bf16.msra.mxu0 0
          %702 = vmatprep.subr.bf16.mxu0 0
          %703 = vmatpush1.bf16.msra.mxu0 0
          %704 = vmatprep.subr.bf16.mxu0 0
          %705 = vmatpush1.bf16.msra.mxu0 0
          %706 = vmatprep.subr.bf16.mxu0 0
          %707 = vmatpush1.bf16.msra.mxu0 0
          %708 = vmatprep.subr.bf16.mxu0 0
          %709 = vmatpush1.bf16.msra.mxu0 0
          %710 = vmatprep.subr.bf16.mxu0 0
          %711 = vmatpush1.bf16.msra.mxu0 0
          %712 = vmatprep.mubr.bf16.mxu0 0
          %713 = vmatmul.mubr.bf16.gmra.mrb[0].mxu0 %v669
          %v714 = vpop.f32.mrb[0].mxu0
          %v715 = vadd.f32 0.0, %v714
          %v716 = vpop.f32.mrb[0].mxu0
          %v717 = vpop.f32.mrb[0].mxu0
          %v718 = vadd.f32 0.0, %v717
          %v719 = vpop.f32.mrb[0].mxu0
          %720 = vmatprep.mubr.bf16.mxu0 0
          %721 = vmatmul.mubr.bf16.gmra.mrb[0].mxu0 %v672
          %v722 = vpop.f32.mrb[0].mxu0
          %v723 = vadd.f32 0.0, %v722
          %v724 = vpop.f32.mrb[0].mxu0
          %v725 = vpop.f32.mrb[0].mxu0
          %v726 = vadd.f32 0.0, %v725
          %v727 = vpop.f32.mrb[0].mxu0
          %728 = vmatprep.mubr.bf16.mxu0 0
          %729 = vmatmul.mubr.bf16.gmra.mrb[0].mxu0 %v675
          %v730 = vpop.f32.mrb[0].mxu0
          %v731 = vadd.f32 0.0, %v730
          %v732 = vpop.f32.mrb[0].mxu0
          %v733 = vpop.f32.mrb[0].mxu0
          %v734 = vadd.f32 0.0, %v733
          %v735 = vpop.f32.mrb[0].mxu0
          %736 = vmatprep.mubr.bf16.mxu0 0
          %737 = vmatmul.mubr.bf16.gmra.mrb[0].mxu0 %v678
          %v738 = vpop.f32.mrb[0].mxu0
          %v739 = vadd.f32 0.0, %v738
          %v740 = vpop.f32.mrb[0].mxu0
          %v741 = vpop.f32.mrb[0].mxu0
          %v742 = vadd.f32 0.0, %v741
          %v743 = vpop.f32.mrb[0].mxu0
          %744 = vdwg.mxu0
          %v749 = vunpack.c.l.b16 %v628
          %v750 = vunpack.c.l.b16 %v629
          %v751 = vunpack.c.l.b16 %v630
          %v752 = vunpack.c.l.b16 %v631
          %v753 = vpack.c.b16 %v750, %v749
          %v754 = vpack.c.b16 %v752, %v751
          %v758 = vsel %vm590, %v624, 0
          %v761 = vsel %vm590, %v625, 0
          %v764 = vsel %vm590, %v626, 0
          %v767 = vsel %vm590, %v627, 0
          %769 = vmatprep.subr.bf16.mxu0 0
          %770 = vmatpush1.bf16.msra.mxu0 %v753
          %771 = vmatprep.subr.bf16.mxu0 0
          %772 = vmatpush1.bf16.msra.mxu0 %v754
          %773 = vmatprep.subr.bf16.mxu0 0
          %774 = vmatpush1.bf16.msra.mxu0 0
          %775 = vmatprep.subr.bf16.mxu0 0
          %776 = vmatpush1.bf16.msra.mxu0 0
          %777 = vmatprep.subr.bf16.mxu0 0
          %778 = vmatpush1.bf16.msra.mxu0 0
          %779 = vmatprep.subr.bf16.mxu0 0
          %780 = vmatpush1.bf16.msra.mxu0 0
          %781 = vmatprep.subr.bf16.mxu0 0
          %782 = vmatpush1.bf16.msra.mxu0 0
          %783 = vmatprep.subr.bf16.mxu0 0
          %784 = vmatpush1.bf16.msra.mxu0 0
          %785 = vmatprep.subr.bf16.mxu0 0
          %786 = vmatpush1.bf16.msra.mxu0 0
          %787 = vmatprep.subr.bf16.mxu0 0
          %788 = vmatpush1.bf16.msra.mxu0 0
          %789 = vmatprep.subr.bf16.mxu0 0
          %790 = vmatpush1.bf16.msra.mxu0 0
          %791 = vmatprep.subr.bf16.mxu0 0
          %792 = vmatpush1.bf16.msra.mxu0 0
          %793 = vmatprep.subr.bf16.mxu0 0
          %794 = vmatpush1.bf16.msra.mxu0 0
          %795 = vmatprep.subr.bf16.mxu0 0
          %796 = vmatpush1.bf16.msra.mxu0 0
          %797 = vmatprep.subr.bf16.mxu0 0
          %798 = vmatpush1.bf16.msra.mxu0 0
          %799 = vmatprep.subr.bf16.mxu0 0
          %800 = vmatpush1.bf16.msra.mxu0 0
          %801 = vmatprep.mubr.bf16.mxu0 0
          %802 = vmatmul.mubr.bf16.gmra.mrb[0].mxu0 %v758
          %v803 = vpop.f32.mrb[0].mxu0
          %v804 = vadd.f32 %v715, %v803
          %v805 = vpop.f32.mrb[0].mxu0
          %v806 = vpop.f32.mrb[0].mxu0
          %v807 = vadd.f32 %v718, %v806
          %v808 = vpop.f32.mrb[0].mxu0
          %809 = vmatprep.mubr.bf16.mxu0 0
          %810 = vmatmul.mubr.bf16.gmra.mrb[0].mxu0 %v761
          %v811 = vpop.f32.mrb[0].mxu0
          %v812 = vadd.f32 %v723, %v811
          %v813 = vpop.f32.mrb[0].mxu0
          %v814 = vpop.f32.mrb[0].mxu0
          %v815 = vadd.f32 %v726, %v814
          %v816 = vpop.f32.mrb[0].mxu0
          %817 = vmatprep.mubr.bf16.mxu0 0
          %818 = vmatmul.mubr.bf16.gmra.mrb[0].mxu0 %v764
          %v819 = vpop.f32.mrb[0].mxu0
          %v820 = vadd.f32 %v731, %v819
          %v821 = vpop.f32.mrb[0].mxu0
          %v822 = vpop.f32.mrb[0].mxu0
          %v823 = vadd.f32 %v734, %v822
          %v824 = vpop.f32.mrb[0].mxu0
          %825 = vmatprep.mubr.bf16.mxu0 0
          %826 = vmatmul.mubr.bf16.gmra.mrb[0].mxu0 %v767
          %v827 = vpop.f32.mrb[0].mxu0
          %v828 = vadd.f32 %v739, %v827
          %v829 = vpop.f32.mrb[0].mxu0
          %v830 = vpop.f32.mrb[0].mxu0
          %v831 = vadd.f32 %v742, %v830
          %v832 = vpop.f32.mrb[0].mxu0
          %833 = vdwg.mxu0
          %v834 = vld [vmem:[%s4] sm:$0x1]
          %v836 = vlaneseq
          %v837 = vshrl.u32 %v836, 7
          %v838 = vsub.s32 0, %v837
          %v839 = vrot.slane %v834, %v838
          %v841 = vadd.f32 %v804, %v839
          %v842 = vadd.f32 %v807, %v839
          %v843 = vadd.f32 %v812, %v839
          %v844 = vadd.f32 %v815, %v839
          %v845 = vadd.f32 %v820, %v839
          %v846 = vadd.f32 %v823, %v839
          %v847 = vadd.f32 %v828, %v839
          %v848 = vadd.f32 %v831, %v839
          %v849 = vmax.f32 %v841, 0.0
          %v850 = vmax.f32 %v842, 0.0
          %v851 = vmax.f32 %v843, 0.0
          %v852 = vmax.f32 %v844, 0.0
          %v853 = vmax.f32 %v845, 0.0
          %v854 = vmax.f32 %v846, 0.0
          %v855 = vmax.f32 %v847, 0.0
          %v856 = vmax.f32 %v848, 0.0
          %v857 = vpack.c.bf16 %v850, %v849
          %v858 = vpack.c.bf16 %v852, %v851
          %v859 = vpack.c.bf16 %v854, %v853
          %v860 = vpack.c.bf16 %v856, %v855
          %v861 = vld [vmem:[%s5] sm:$0xf]
          %v862 = vld [vmem:[%s5 + $0x4] sm:$0xf]
          %v863 = vld [vmem:[%s5 + $0x8] sm:$0xf]
          %v864 = vld [vmem:[%s5 + $0xc] sm:$0xf]
          %v865 = vld [vmem:[%s6] sm:$0xf]
          %v866 = vld [vmem:[%s6 + $0x4] sm:$0xf]
          %v867 = vld [vmem:[%s6 + $0x8] sm:$0xf]
          %v868 = vld [vmem:[%s6 + $0xc] sm:$0xf]
          %v873 = vunpack.c.l.b16 %v865
          %v874 = vunpack.c.l.b16 %v866
          %v875 = vunpack.c.l.b16 %v867
          %v876 = vunpack.c.l.b16 %v868
          %v877 = vpack.c.b16 %v874, %v873
          %v878 = vpack.c.b16 %v876, %v875
          %v882 = vsel %vm590, %v857, 0
          %v885 = vsel %vm590, %v858, 0
          %v888 = vsel %vm590, %v859, 0
          %v891 = vsel %vm590, %v860, 0
          %893 = vmatprep.subr.bf16.mxu0 0
          %894 = vmatpush1.bf16.msra.mxu0 %v877
          %895 = vmatprep.subr.bf16.mxu0 0
          %896 = vmatpush1.bf16.msra.mxu0 %v878
          %897 = vmatprep.subr.bf16.mxu0 0
          %898 = vmatpush1.bf16.msra.mxu0 0
          %899 = vmatprep.subr.bf16.mxu0 0
          %900 = vmatpush1.bf16.msra.mxu0 0
          %901 = vmatprep.subr.bf16.mxu0 0
          %902 = vmatpush1.bf16.msra.mxu0 0
          %903 = vmatprep.subr.bf16.mxu0 0
          %904 = vmatpush1.bf16.msra.mxu0 0
          %905 = vmatprep.subr.bf16.mxu0 0
          %906 = vmatpush1.bf16.msra.mxu0 0
          %907 = vmatprep.subr.bf16.mxu0 0
          %908 = vmatpush1.bf16.msra.mxu0 0
          %909 = vmatprep.subr.bf16.mxu0 0
          %910 = vmatpush1.bf16.msra.mxu0 0
          %911 = vmatprep.subr.bf16.mxu0 0
          %912 = vmatpush1.bf16.msra.mxu0 0
          %913 = vmatprep.subr.bf16.mxu0 0
          %914 = vmatpush1.bf16.msra.mxu0 0
          %915 = vmatprep.subr.bf16.mxu0 0
          %916 = vmatpush1.bf16.msra.mxu0 0
          %917 = vmatprep.subr.bf16.mxu0 0
          %918 = vmatpush1.bf16.msra.mxu0 0
          %919 = vmatprep.subr.bf16.mxu0 0
          %920 = vmatpush1.bf16.msra.mxu0 0
          %921 = vmatprep.subr.bf16.mxu0 0
          %922 = vmatpush1.bf16.msra.mxu0 0
          %923 = vmatprep.subr.bf16.mxu0 0
          %924 = vmatpush1.bf16.msra.mxu0 0
          %925 = vmatprep.mubr.bf16.mxu0 0
          %926 = vmatmul.mubr.bf16.gmra.mrb[0].mxu0 %v882
          %v927 = vpop.f32.mrb[0].mxu0
          %v928 = vadd.f32 0.0, %v927
          %v929 = vpop.f32.mrb[0].mxu0
          %v930 = vpop.f32.mrb[0].mxu0
          %v931 = vadd.f32 0.0, %v930
          %v932 = vpop.f32.mrb[0].mxu0
          %933 = vmatprep.mubr.bf16.mxu0 0
          %934 = vmatmul.mubr.bf16.gmra.mrb[0].mxu0 %v885
          %v935 = vpop.f32.mrb[0].mxu0
          %v936 = vadd.f32 0.0, %v935
          %v937 = vpop.f32.mrb[0].mxu0
          %v938 = vpop.f32.mrb[0].mxu0
          %v939 = vadd.f32 0.0, %v938
          %v940 = vpop.f32.mrb[0].mxu0
          %941 = vmatprep.mubr.bf16.mxu0 0
          %942 = vmatmul.mubr.bf16.gmra.mrb[0].mxu0 %v888
          %v943 = vpop.f32.mrb[0].mxu0
          %v944 = vadd.f32 0.0, %v943
          %v945 = vpop.f32.mrb[0].mxu0
          %v946 = vpop.f32.mrb[0].mxu0
          %v947 = vadd.f32 0.0, %v946
          %v948 = vpop.f32.mrb[0].mxu0
          %949 = vmatprep.mubr.bf16.mxu0 0
          %950 = vmatmul.mubr.bf16.gmra.mrb[0].mxu0 %v891
          %v951 = vpop.f32.mrb[0].mxu0
          %v952 = vadd.f32 0.0, %v951
          %v953 = vpop.f32.mrb[0].mxu0
          %v954 = vpop.f32.mrb[0].mxu0
          %v955 = vadd.f32 0.0, %v954
          %v956 = vpop.f32.mrb[0].mxu0
          %957 = vdwg.mxu0
          %v962 = vunpack.c.l.b16 %v861
          %v963 = vunpack.c.l.b16 %v862
          %v964 = vunpack.c.l.b16 %v863
          %v965 = vunpack.c.l.b16 %v864
          %v966 = vpack.c.b16 %v963, %v962
          %v967 = vpack.c.b16 %v965, %v964
          %970 = vmatprep.subr.bf16.mxu0 0
          %971 = vmatpush1.bf16.msra.mxu0 %v966
          %972 = vmatprep.subr.bf16.mxu0 0
          %973 = vmatpush1.bf16.msra.mxu0 %v967
          %974 = vmatprep.subr.bf16.mxu0 0
          %975 = vmatpush1.bf16.msra.mxu0 0
          %976 = vmatprep.subr.bf16.mxu0 0
          %977 = vmatpush1.bf16.msra.mxu0 0
          %978 = vmatprep.subr.bf16.mxu0 0
          %979 = vmatpush1.bf16.msra.mxu0 0
          %980 = vmatprep.subr.bf16.mxu0 0
          %981 = vmatpush1.bf16.msra.mxu0 0
          %982 = vmatprep.subr.bf16.mxu0 0
          %983 = vmatpush1.bf16.msra.mxu0 0
          %984 = vmatprep.subr.bf16.mxu0 0
          %985 = vmatpush1.bf16.msra.mxu0 0
          %986 = vmatprep.subr.bf16.mxu0 0
          %987 = vmatpush1.bf16.msra.mxu0 0
          %988 = vmatprep.subr.bf16.mxu0 0
          %989 = vmatpush1.bf16.msra.mxu0 0
          %990 = vmatprep.subr.bf16.mxu0 0
          %991 = vmatpush1.bf16.msra.mxu0 0
          %992 = vmatprep.subr.bf16.mxu0 0
          %993 = vmatpush1.bf16.msra.mxu0 0
          %994 = vmatprep.subr.bf16.mxu0 0
          %995 = vmatpush1.bf16.msra.mxu0 0
          %996 = vmatprep.subr.bf16.mxu0 0
          %997 = vmatpush1.bf16.msra.mxu0 0
          %998 = vmatprep.subr.bf16.mxu0 0
          %999 = vmatpush1.bf16.msra.mxu0 0
          %1000 = vmatprep.subr.bf16.mxu0 0
          %1001 = vmatpush1.bf16.msra.mxu0 0
          %1002 = vmatprep.mubr.bf16.mxu0 0
          %1003 = vmatmul.mubr.bf16.gmra.mrb[0].mxu0 %v669
          %v1004 = vpop.f32.mrb[0].mxu0
          %v1005 = vadd.f32 %v928, %v1004
          %v1006 = vpop.f32.mrb[0].mxu0
          %v1007 = vpop.f32.mrb[0].mxu0
          %v1008 = vadd.f32 %v931, %v1007
          %v1009 = vpop.f32.mrb[0].mxu0
          %1010 = vmatprep.mubr.bf16.mxu0 0
          %1011 = vmatmul.mubr.bf16.gmra.mrb[0].mxu0 %v672
          %v1012 = vpop.f32.mrb[0].mxu0
          %v1013 = vadd.f32 %v936, %v1012
          %v1014 = vpop.f32.mrb[0].mxu0
          %v1015 = vpop.f32.mrb[0].mxu0
          %v1016 = vadd.f32 %v939, %v1015
          %v1017 = vpop.f32.mrb[0].mxu0
          %1018 = vmatprep.mubr.bf16.mxu0 0
          %1019 = vmatmul.mubr.bf16.gmra.mrb[0].mxu0 %v675
          %v1020 = vpop.f32.mrb[0].mxu0
          %v1021 = vadd.f32 %v944, %v1020
          %v1022 = vpop.f32.mrb[0].mxu0
          %v1023 = vpop.f32.mrb[0].mxu0
          %v1024 = vadd.f32 %v947, %v1023
          %v1025 = vpop.f32.mrb[0].mxu0
          %1026 = vmatprep.mubr.bf16.mxu0 0
          %1027 = vmatmul.mubr.bf16.gmra.mrb[0].mxu0 %v678
          %v1028 = vpop.f32.mrb[0].mxu0
          %v1029 = vadd.f32 %v952, %v1028
          %v1030 = vpop.f32.mrb[0].mxu0
          %v1031 = vpop.f32.mrb[0].mxu0
          %v1032 = vadd.f32 %v955, %v1031
          %v1033 = vpop.f32.mrb[0].mxu0
          %1034 = vdwg.mxu0
          %v1035 = vld [vmem:[%s7] sm:$0x1]
          %v1037 = vlaneseq
          %v1038 = vshrl.u32 %v1037, 7
          %v1039 = vsub.s32 0, %v1038
          %v1040 = vrot.slane %v1035, %v1039
          %v1042 = vadd.f32 %v1005, %v1040
          %v1043 = vadd.f32 %v1008, %v1040
          %v1044 = vadd.f32 %v1013, %v1040
          %v1045 = vadd.f32 %v1016, %v1040
          %v1046 = vadd.f32 %v1021, %v1040
          %v1047 = vadd.f32 %v1024, %v1040
          %v1048 = vadd.f32 %v1029, %v1040
          %v1049 = vadd.f32 %v1032, %v1040
          %vm1050 = vcmask 31744
          %1051 = vst.msk [vmem:[%s392] sm:$0xff] %vm1050, %v1042
          %1052 = vst.msk [vmem:[%s392 + $0x8] sm:$0xff] %vm1050, %v1043
          %1053 = vst.msk [vmem:[%s392 + $0x10] sm:$0xff] %vm1050, %v1044
          %1054 = vst.msk [vmem:[%s392 + $0x18] sm:$0xff] %vm1050, %v1045
          %1055 = vst.msk [vmem:[%s392 + $0x20] sm:$0xff] %vm1050, %v1046
          %1056 = vst.msk [vmem:[%s392 + $0x28] sm:$0xff] %vm1050, %v1047
          %1057 = vst.msk [vmem:[%s392 + $0x30] sm:$0xff] %vm1050, %v1048
          %1058 = vst.msk [vmem:[%s392 + $0x38] sm:$0xff] %vm1050, %v1049
        $region101: #{net_forward.3} parent=88 // pred_fallthru
          _
        %s1059 = smul.u32 8, %s23
        %p1060 = scmp.lt.s32.totalorder %s1059, 31
        %s1061 = scalar_select %p1060, %s1059, 31
        %s1062 = smul.addr %s1061, 8
        %s1063 = scalar_lea.vmem %s8, %s1062
        // Predicated region
        $region102: #{net_forward.3} parent=88 // pred_check
          %p1064 = pneg %p224
        $region103: #{net_forward.3} parent=88 // pred_check_branch
          %1066 = sbr.rel (%p1064) target = $region105
        $region104: #{net_forward.3} parent=88 // pred_region
          %s1067 = smul.u32 8, %s23
        $region105: #{net_forward.3} parent=88 // pred_fallthru
          _
      $region89: #{net_forward.3} parent=5 // pred_fallthru
        _
      %p1068 = scmp.le.s32.totalorder 2, %s14
      // Predicated region
      $region106: #{net_forward.3} parent=5 // pred_check
        %p1069 = pneg %p1068
      $region107: #{net_forward.3} parent=5 // pred_check_branch
        %1071 = sbr.rel (%p1069) target = $region109
      $region108: #{net_forward.3} parent=5 // pred_region
        %s1072 = ssub.s32 %s14, 2
        // Predicated region
        $region110: #{net_forward.3} parent=108 // pred_check
          %p1073 = pneg %p230
        $region111: #{net_forward.3} parent=108 // pred_check_branch
          %1075 = sbr.rel (%p1073) target = $region113
        $region112: #{net_forward.3} parent=108 // pred_region
          %s1076 = smul.u32 8, %s25
          %p1077 = scmp.lt.s32.totalorder %s1076, 31
          %s1078 = scalar_select %p1077, %s1076, 31
          %s1079 = smul.addr %s1078, 8
          %s1080 = scalar_lea.vmem %s8, %s1079
        $region113: #{net_forward.3} parent=108 // pred_fallthru
          _
      $region109: #{net_forward.3} parent=5 // pred_fallthru
        _
    $region6: #{net_forward.3} parent=1 // loop_footer
      %s18 = sadd.s32 1, %s14
    $region7: #{net_forward.3} parent=1 // loop_footer_branch
      %13 = sbr.rel target = $region3
    $region8: #{net_forward.3} parent=1 // loop_exit
      _

</llo_original>
